<compile_context>
chip_gen: v5e
topology: v5e:2x2
jax: 0.10.0
libtpu: 0.0.40
codegen_flags: <defaults>
</compile_context>

<pallas_src>
import jax
import jax.numpy as jnp
from jax.experimental import pallas as pl
from jax.experimental.pallas import tpu as pltpu

# ----------------------- synthetic architecture constants -----------------------
Z_SIZE = 16
H_SIZES = (64, 64)                    # SkipMLP hidden sizes (2nd layer gets a skip)
IMG_DECODE_SHAPE = (32, 4, 4)         # (C, H, W) fed into DecoderCNN
IMG_DECODE_SIZE = 32 * 4 * 4          # 512
CNN_CHANNELS = (32, 16, 8, 3)         # ConvTranspose2d(k=2, s=2) channel chain
_S0 = IMG_DECODE_SHAPE[1] * IMG_DECODE_SHAPE[2]   # 16 spatial positions at 4x4
_C_OUT = CNN_CHANNELS[-1]                         # 3


# ------------------------------- fused Pallas kernel -----------------------------
def _decoder_kernel(zt_ref, wm1_ref, bm1_ref, wm2_ref, bm2_ref, wm3_ref, bm3_ref,
                    wt1_ref, bt1_ref, wt2_ref, bt2_ref, wt3_ref, bt3_ref,
                    out_ref, a0_ref, a1_ref):
    f32 = jnp.float32
    c0, c1, c2, _ = CNN_CHANNELS
    tb = zt_ref.shape[1]                     # batch tile (lanes)
    cdt = wm1_ref.dtype                      # MXU operand dtype (f32 default, bf16 optional)

    # ---------------- SkipMLP, transposed: rows = features, lanes = batch ----------------
    zt = zt_ref[...].astype(cdt)                                              # (16, TB)
    h = jnp.dot(wm1_ref[...], zt, preferred_element_type=f32) + bm1_ref[...]
    h = jnp.maximum(h, 0.0)                                                   # (64, TB)
    g = jnp.dot(wm2_ref[...], h.astype(cdt), preferred_element_type=f32) + bm2_ref[...]
    h = jnp.maximum(g, 0.0) + h                                               # skip (64 == 64)
    x0 = jnp.dot(wm3_ref[...], h.astype(cdt), preferred_element_type=f32) + bm3_ref[...]
    # x0: (512, TB); rows ordered (p4, c0) thanks to the pack-time column reorder of wm3.

    # ----- relayout at the smallest tensor: move the 16 spatial positions from rows to lanes.
    # 16 aligned, TB-lane-wide block copies -> a0 (32, 16*TB), lanes = (p4, b).
    for p in range(_S0):
        a0_ref[:, p * tb:(p + 1) * tb] = x0[p * c0:(p + 1) * c0, :].astype(a0_ref.dtype)

    # ----- conv-transpose 1: (4*c1, c0) @ (c0, 16*TB) -> (64, 16*TB), rows=(q1, co1), ReLU --
    y = jnp.dot(wt1_ref[...], a0_ref[...], preferred_element_type=f32) + bt1_ref[...]
    y = jnp.maximum(y, 0.0)
    # pixel shuffle: fold q1 = (r1, s1) into lanes -> a1 (16, 64*TB), lanes = (q1, p4, b).
    for q in range(4):
        a1_ref[:, q * (_S0 * tb):(q + 1) * (_S0 * tb)] = \
            y[q * c1:(q + 1) * c1, :].astype(a1_ref.dtype)

    # ----- conv-transpose 2: (4*c2, c1) @ (c1, 64*TB) -> (32, 64*TB), rows=(q2, co2), ReLU --
    y = jnp.dot(wt2_ref[...], a1_ref[...], preferred_element_type=f32) + bt2_ref[...]
    y = jnp.maximum(y, 0.0)

    # ----- conv-transpose 3 (no ReLU): one GEMM per q2 = (r2, s2), written directly into the
    # (4, 12, 64*TB) output block (no third scratch, no final interleave copies).
    for q in range(4):
        o = jnp.dot(wt3_ref[...], y[q * c2:(q + 1) * c2, :].astype(cdt),
                    preferred_element_type=f32) + bt3_ref[...]
        out_ref[q] = o.astype(out_ref.dtype)


def _full_spec(shape):
    nd = len(shape)
    return pl.BlockSpec(shape, lambda g: (0,) * nd)


def decoder_forward(z, packed, *, tb=128):
    """z: (B, Z_SIZE) -> (B, 3*32*32), matching PyTorch's NCHW flatten order."""
    batch = z.shape[0]
    # Batch tile: multiple of 8 (f32 sublanes), capped at `tb` (128 default; raise on v6e/v7x).
    TB = int(min(tb, max(8, ((batch + 7) // 8) * 8)))
    b_pad = ((batch + TB - 1) // TB) * TB
    grid_len = b_pad // TB
    if b_pad != batch:
        z = jnp.pad(z, ((0, b_pad - batch), (0, 0)))
    zt = z.T                                      # (Z, B_pad): batch lives in lanes in-kernel.

    args = packed["args"]
    cdt = args[0].dtype
    lanes_per_block = 4 * _S0 * TB                # 64*TB lanes per grid step

    in_specs = [pl.BlockSpec((Z_SIZE, TB), lambda g: (0, g))]
    # TODO(synk): the 12 constant weight/bias inputs could be single-buffered
    #             (pipeline_mode=pl.Buffered(1)) to save ~165 KB VMEM; default double
    #             buffering kept for lowering robustness.
    in_specs += [_full_spec(a.shape) for a in args]

    out = pl.pallas_call(
        _decoder_kernel,
        out_shape=jax.ShapeDtypeStruct((4, 4 * _C_OUT, b_pad * 4 * _S0), jnp.float32),
        grid=(grid_len,),
        in_specs=in_specs,
        out_specs=pl.BlockSpec((4, 4 * _C_OUT, lanes_per_block), lambda g: (0, 0, g)),
        scratch_shapes=[
            pltpu.VMEM((CNN_CHANNELS[0], _S0 * TB), cdt),        # a0: (32, 16*TB)
            pltpu.VMEM((CNN_CHANNELS[1], 4 * _S0 * TB), cdt),    # a1: (16, 64*TB)
        ],
        compiler_params=pltpu.CompilerParams(dimension_semantics=("parallel",)),
    )(zt, *args)

    # De-interleave to PyTorch NCHW flatten order: pure reshape + transpose (no gather).
    # out rows  = (r2, s2) x (co, r3, s3); lanes = (g, r1, s1, i0, j0, b_local).
    h0, w0 = IMG_DECODE_SHAPE[1], IMG_DECODE_SHAPE[2]
    x = out.reshape(2, 2, _C_OUT, 2, 2, grid_len, 2, 2, h0, w0, TB)
    x = jnp.transpose(x, (5, 10, 2, 8, 6, 0, 3, 9, 7, 1, 4))   # (g, b, co, i0,r1,r2,r3, j0,s1,s2,s3)
    return x.reshape(grid_len * TB, _C_OUT * (8 * h0) * (8 * w0))[:batch]


# ------------------------------ parameter setup / packing -------------------------------------
def _init_linear(key, fan_in, fan_out):
    kw, kb = jax.random.split(key)
    bound = 1.0 / (fan_in ** 0.5)
    w = jax.random.uniform(kw, (fan_in, fan_out), jnp.float32, -bound, bound)
    b = jax.random.uniform(kb, (fan_out,), jnp.float32, -bound, bound)
    return w, b


def _init_conv_t(key, cin, cout):
    kw, kb = jax.random.split(key)
    bound = 1.0 / ((cin * 4) ** 0.5)
    w = jax.random.uniform(kw, (cin, cout, 2, 2), jnp.float32, -bound, bound)
    b = jax.random.uniform(kb, (cout,), jnp.float32, -bound, bound)
    return w, b


def init_decoder_params(key):
    keys = jax.random.split(key, len(H_SIZES) + 1 + (len(CNN_CHANNELS) - 1))
    ki = iter(keys)
    params = {"mlp_hidden": [], "cnn": []}
    prev = Z_SIZE
    for hsz in H_SIZES:
        params["mlp_hidden"].append(_init_linear(next(ki), prev, hsz))
        prev = hsz
    params["mlp_out"] = _init_linear(next(ki), prev, IMG_DECODE_SIZE)
    for cin, cout in zip(CNN_CHANNELS[:-1], CNN_CHANNELS[1:]):
        params["cnn"].append(_init_conv_t(next(ki), cin, cout))
    return params


def pack_decoder_params(params, compute_dtype=jnp.float32):
    """Pre-compute GEMM-form parameters once.  compute_dtype=jnp.bfloat16 enables the
    bf16 MXU path on v6e/v7x (biases / accumulation stay f32)."""
    assert tuple(H_SIZES) == (64, 64) and len(params["mlp_hidden"]) == 2
    cd = compute_dtype
    (w1, b1), (w2, b2) = params["mlp_hidden"]
    w3, b3 = params["mlp_out"]

    args = [w1.T.astype(cd), b1.reshape(-1, 1),          # (64, 16), (64, 1)
            w2.T.astype(cd), b2.reshape(-1, 1)]          # (64, 64), (64, 1)

    # mlp_out, transposed and with output rows reordered from (c0, p4) to (p4, c0) so the
    # in-kernel relayout is 16 contiguous (32, TB) block copies.
    c0 = IMG_DECODE_SHAPE[0]
    w3t = jnp.transpose(w3.T.reshape(c0, _S0, H_SIZES[-1]), (1, 0, 2)).reshape(IMG_DECODE_SIZE,
                                                                               H_SIZES[-1])
    b3t = b3.reshape(c0, _S0).T.reshape(IMG_DECODE_SIZE, 1)
    args += [w3t.astype(cd), b3t]

    # ConvT1 / ConvT2: GEMM weights with rows ordered (r, s, co)  ->  (4*Cout, Cin)
    for w, b in params["cnn"][:2]:
        cin, cout = w.shape[0], w.shape[1]
        wt = jnp.transpose(w, (2, 3, 1, 0)).reshape(4 * cout, cin)
        bt = jnp.tile(b, 4).reshape(4 * cout, 1)
        args += [wt.astype(cd), bt]

    # ConvT3: rows ordered (co, r, s) — the row reorder is folded into the weight so the
    # post-kernel fix-up is a pure reshape/transpose.
    w, b = params["cnn"][2]
    cin, cout = w.shape[0], w.shape[1]
    wt3 = jnp.transpose(w, (1, 2, 3, 0)).reshape(cout * 4, cin)
    bt3 = jnp.repeat(b, 4).reshape(cout * 4, 1)
    args += [wt3.astype(cd), bt3]
    return {"args": args}


# ------------------------------ pure-JAX reference (for validation) ---------------------------
def reference_forward(z, params):
    hp = jax.lax.Precision.HIGHEST
    x = z
    for w, b in params["mlp_hidden"]:
        y = jnp.maximum(jnp.dot(x, w, precision=hp) + b, 0.0)
        x = y + x if w.shape[0] == w.shape[1] else y
    w, b = params["mlp_out"]
    x = jnp.dot(x, w, precision=hp) + b
    batch = z.shape[0]
    x = x.reshape(batch, *IMG_DECODE_SHAPE)
    n_cnn = len(params["cnn"])
    for idx, (w, b) in enumerate(params["cnn"]):
        t = jnp.einsum("bcij,cors->boirjs", x, w, precision=hp)
        bsz, cout, h, _, wd, _ = t.shape
        x = t.reshape(bsz, cout, 2 * h, 2 * wd) + b[None, :, None, None]
        if idx < n_cnn - 1:
            x = jnp.maximum(x, 0.0)
    return x.reshape(batch, -1)


# ----------------------------------------- main ------------------------------------------------
if __name__ == "__main__":
    key = jax.random.PRNGKey(0)
    kz, kp = jax.random.split(key)
    batch = 2
    z = jax.random.normal(kz, (batch, Z_SIZE), dtype=jnp.float32)
    params = init_decoder_params(kp)
    packed = pack_decoder_params(params)   # pass compute_dtype=jnp.bfloat16 for v6e/v7x MXU path

    out = jax.jit(decoder_forward)(z, packed)
    out = jax.block_until_ready(out)

    expected = (batch, CNN_CHANNELS[-1] * IMG_DECODE_SHAPE[1] * 8 * IMG_DECODE_SHAPE[2] * 8)
    assert out.shape == expected, (out.shape, expected)
    assert bool(jnp.all(jnp.isfinite(out)))
    ref = reference_forward(z, params)
    max_err = float(jnp.max(jnp.abs(out - ref)))
    assert jnp.allclose(out, ref, rtol=1e-3, atol=1e-3), max_err
    print("KERNEL_OK")
</pallas_src>

<mosaic_0001>
module attributes {stable_mosaic.version = 11 : i64} {
  func.func @_decoder_kernel(%arg0: i32, %arg1: memref<16x8xf32, #tpu.memory_space<vmem>>, %arg2: memref<64x16xf32, #tpu.memory_space<vmem>>, %arg3: memref<64x1xf32, #tpu.memory_space<vmem>>, %arg4: memref<64x64xf32, #tpu.memory_space<vmem>>, %arg5: memref<64x1xf32, #tpu.memory_space<vmem>>, %arg6: memref<512x64xf32, #tpu.memory_space<vmem>>, %arg7: memref<512x1xf32, #tpu.memory_space<vmem>>, %arg8: memref<64x32xf32, #tpu.memory_space<vmem>>, %arg9: memref<64x1xf32, #tpu.memory_space<vmem>>, %arg10: memref<32x16xf32, #tpu.memory_space<vmem>>, %arg11: memref<32x1xf32, #tpu.memory_space<vmem>>, %arg12: memref<12x8xf32, #tpu.memory_space<vmem>>, %arg13: memref<12x1xf32, #tpu.memory_space<vmem>>, %arg14: memref<4x12x512xf32, #tpu.memory_space<vmem>>, %arg15: memref<32x128xf32, #tpu.memory_space<vmem>>, %arg16: memref<16x512xf32, #tpu.memory_space<vmem>>) attributes {dimension_semantics = [#tpu.dimension_semantics<parallel>], iteration_bounds = array<i64: 1>, scalar_prefetch = 0 : i64, scratch_operands = 2 : i64, tpu.core_type = #tpu.core_type<tc>, window_params = [{transform_indices = @transform_0, window_bounds = array<i64: 16, 8>}, {pipeline_mode = #tpu.pipeline_mode<synchronous>, transform_indices = @transform_1, window_bounds = array<i64: 64, 16>}, {pipeline_mode = #tpu.pipeline_mode<synchronous>, transform_indices = @transform_2, window_bounds = array<i64: 64, 1>}, {pipeline_mode = #tpu.pipeline_mode<synchronous>, transform_indices = @transform_3, window_bounds = array<i64: 64, 64>}, {pipeline_mode = #tpu.pipeline_mode<synchronous>, transform_indices = @transform_4, window_bounds = array<i64: 64, 1>}, {pipeline_mode = #tpu.pipeline_mode<synchronous>, transform_indices = @transform_5, window_bounds = array<i64: 512, 64>}, {pipeline_mode = #tpu.pipeline_mode<synchronous>, transform_indices = @transform_6, window_bounds = array<i64: 512, 1>}, {pipeline_mode = #tpu.pipeline_mode<synchronous>, transform_indices = @transform_7, window_bounds = array<i64: 64, 32>}, {pipeline_mode = #tpu.pipeline_mode<synchronous>, transform_indices = @transform_8, window_bounds = array<i64: 64, 1>}, {pipeline_mode = #tpu.pipeline_mode<synchronous>, transform_indices = @transform_9, window_bounds = array<i64: 32, 16>}, {pipeline_mode = #tpu.pipeline_mode<synchronous>, transform_indices = @transform_10, window_bounds = array<i64: 32, 1>}, {pipeline_mode = #tpu.pipeline_mode<synchronous>, transform_indices = @transform_11, window_bounds = array<i64: 12, 8>}, {pipeline_mode = #tpu.pipeline_mode<synchronous>, transform_indices = @transform_12, window_bounds = array<i64: 12, 1>}, {transform_indices = @transform_13, window_bounds = array<i64: 4, 12, 512>}]} {
    %c0 = arith.constant 0 : index
    %c0_0 = arith.constant 0 : index
    %0 = vector.load %arg1[%c0, %c0_0] : memref<16x8xf32, #tpu.memory_space<vmem>>, vector<16x8xf32>
    %c0_1 = arith.constant 0 : index
    %c0_2 = arith.constant 0 : index
    %1 = vector.load %arg2[%c0_1, %c0_2] : memref<64x16xf32, #tpu.memory_space<vmem>>, vector<64x16xf32>
    %cst = arith.constant dense<0.000000e+00> : vector<64x8xf32>
    %2 = tpu.matmul %1, %0, %cst {dimension_numbers = #tpu.dot_dimension_numbers<[1], [0], [0], [1], [0, 0, 1, 1], [], []>} : vector<64x16xf32>, vector<16x8xf32>, vector<64x8xf32> -> vector<64x8xf32>
    %c0_3 = arith.constant 0 : index
    %c0_4 = arith.constant 0 : index
    %3 = vector.load %arg3[%c0_3, %c0_4] : memref<64x1xf32, #tpu.memory_space<vmem>>, vector<64x1xf32>
    %4 = vector.broadcast %3 : vector<64x1xf32> to vector<64x8xf32>
    %5 = arith.addf %2, %4 : vector<64x8xf32>
    %cst_5 = arith.constant 0.000000e+00 : f32
    %6 = vector.broadcast %cst_5 : f32 to vector<64x8xf32>
    %7 = arith.maximumf %5, %6 : vector<64x8xf32>
    %c0_6 = arith.constant 0 : index
    %c0_7 = arith.constant 0 : index
    %8 = vector.load %arg4[%c0_6, %c0_7] : memref<64x64xf32, #tpu.memory_space<vmem>>, vector<64x64xf32>
    %cst_8 = arith.constant dense<0.000000e+00> : vector<64x8xf32>
    %9 = tpu.matmul %8, %7, %cst_8 {dimension_numbers = #tpu.dot_dimension_numbers<[1], [0], [0], [1], [0, 0, 1, 1], [], []>} : vector<64x64xf32>, vector<64x8xf32>, vector<64x8xf32> -> vector<64x8xf32>
    %c0_9 = arith.constant 0 : index
    %c0_10 = arith.constant 0 : index
    %10 = vector.load %arg5[%c0_9, %c0_10] : memref<64x1xf32, #tpu.memory_space<vmem>>, vector<64x1xf32>
    %11 = vector.broadcast %10 : vector<64x1xf32> to vector<64x8xf32>
    %12 = arith.addf %9, %11 : vector<64x8xf32>
    %cst_11 = arith.constant 0.000000e+00 : f32
    %13 = vector.broadcast %cst_11 : f32 to vector<64x8xf32>
    %14 = arith.maximumf %12, %13 : vector<64x8xf32>
    %15 = arith.addf %14, %7 : vector<64x8xf32>
    %c0_12 = arith.constant 0 : index
    %c0_13 = arith.constant 0 : index
    %16 = vector.load %arg6[%c0_12, %c0_13] : memref<512x64xf32, #tpu.memory_space<vmem>>, vector<512x64xf32>
    %cst_14 = arith.constant dense<0.000000e+00> : vector<512x8xf32>
    %17 = tpu.matmul %16, %15, %cst_14 {dimension_numbers = #tpu.dot_dimension_numbers<[1], [0], [0], [1], [0, 0, 1, 1], [], []>} : vector<512x64xf32>, vector<64x8xf32>, vector<512x8xf32> -> vector<512x8xf32>
    %c0_15 = arith.constant 0 : index
    %c0_16 = arith.constant 0 : index
    %18 = vector.load %arg7[%c0_15, %c0_16] : memref<512x1xf32, #tpu.memory_space<vmem>>, vector<512x1xf32>
    %19 = vector.broadcast %18 : vector<512x1xf32> to vector<512x8xf32>
    %20 = arith.addf %17, %19 : vector<512x8xf32>
    %21 = vector.extract_strided_slice %20 {offsets = [0, 0], sizes = [32, 8], strides = [1, 1]} : vector<512x8xf32> to vector<32x8xf32>
    %c0_17 = arith.constant 0 : index
    %c0_18 = arith.constant 0 : index
    %22 = vector.load %arg15[%c0_17, %c0_18] : memref<32x128xf32, #tpu.memory_space<vmem>>, vector<32x8xf32>
    tpu.vector_store %arg15[%c0_17, %c0_18], %21 {strides = array<i32>} : memref<32x128xf32, #tpu.memory_space<vmem>>, vector<32x8xf32>,
    %23 = vector.extract_strided_slice %20 {offsets = [32, 0], sizes = [32, 8], strides = [1, 1]} : vector<512x8xf32> to vector<32x8xf32>
    %c0_19 = arith.constant 0 : index
    %c8 = arith.constant 8 : index
    %24 = vector.load %arg15[%c0_19, %c8] : memref<32x128xf32, #tpu.memory_space<vmem>>, vector<32x8xf32>
    tpu.vector_store %arg15[%c0_19, %c8], %23 {strides = array<i32>} : memref<32x128xf32, #tpu.memory_space<vmem>>, vector<32x8xf32>,
    %25 = vector.extract_strided_slice %20 {offsets = [64, 0], sizes = [32, 8], strides = [1, 1]} : vector<512x8xf32> to vector<32x8xf32>
    %c0_20 = arith.constant 0 : index
    %c16 = arith.constant 16 : index
    %26 = vector.load %arg15[%c0_20, %c16] : memref<32x128xf32, #tpu.memory_space<vmem>>, vector<32x8xf32>
    tpu.vector_store %arg15[%c0_20, %c16], %25 {strides = array<i32>} : memref<32x128xf32, #tpu.memory_space<vmem>>, vector<32x8xf32>,
    %27 = vector.extract_strided_slice %20 {offsets = [96, 0], sizes = [32, 8], strides = [1, 1]} : vector<512x8xf32> to vector<32x8xf32>
    %c0_21 = arith.constant 0 : index
    %c24 = arith.constant 24 : index
    %28 = vector.load %arg15[%c0_21, %c24] : memref<32x128xf32, #tpu.memory_space<vmem>>, vector<32x8xf32>
    tpu.vector_store %arg15[%c0_21, %c24], %27 {strides = array<i32>} : memref<32x128xf32, #tpu.memory_space<vmem>>, vector<32x8xf32>,
    %29 = vector.extract_strided_slice %20 {offsets = [128, 0], sizes = [32, 8], strides = [1, 1]} : vector<512x8xf32> to vector<32x8xf32>
    %c0_22 = arith.constant 0 : index
    %c32 = arith.constant 32 : index
    %30 = vector.load %arg15[%c0_22, %c32] : memref<32x128xf32, #tpu.memory_space<vmem>>, vector<32x8xf32>
    tpu.vector_store %arg15[%c0_22, %c32], %29 {strides = array<i32>} : memref<32x128xf32, #tpu.memory_space<vmem>>, vector<32x8xf32>,
    %31 = vector.extract_strided_slice %20 {offsets = [160, 0], sizes = [32, 8], strides = [1, 1]} : vector<512x8xf32> to vector<32x8xf32>
    %c0_23 = arith.constant 0 : index
    %c40 = arith.constant 40 : index
    %32 = vector.load %arg15[%c0_23, %c40] : memref<32x128xf32, #tpu.memory_space<vmem>>, vector<32x8xf32>
    tpu.vector_store %arg15[%c0_23, %c40], %31 {strides = array<i32>} : memref<32x128xf32, #tpu.memory_space<vmem>>, vector<32x8xf32>,
    %33 = vector.extract_strided_slice %20 {offsets = [192, 0], sizes = [32, 8], strides = [1, 1]} : vector<512x8xf32> to vector<32x8xf32>
    %c0_24 = arith.constant 0 : index
    %c48 = arith.constant 48 : index
    %34 = vector.load %arg15[%c0_24, %c48] : memref<32x128xf32, #tpu.memory_space<vmem>>, vector<32x8xf32>
    tpu.vector_store %arg15[%c0_24, %c48], %33 {strides = array<i32>} : memref<32x128xf32, #tpu.memory_space<vmem>>, vector<32x8xf32>,
    %35 = vector.extract_strided_slice %20 {offsets = [224, 0], sizes = [32, 8], strides = [1, 1]} : vector<512x8xf32> to vector<32x8xf32>
    %c0_25 = arith.constant 0 : index
    %c56 = arith.constant 56 : index
    %36 = vector.load %arg15[%c0_25, %c56] : memref<32x128xf32, #tpu.memory_space<vmem>>, vector<32x8xf32>
    tpu.vector_store %arg15[%c0_25, %c56], %35 {strides = array<i32>} : memref<32x128xf32, #tpu.memory_space<vmem>>, vector<32x8xf32>,
    %37 = vector.extract_strided_slice %20 {offsets = [256, 0], sizes = [32, 8], strides = [1, 1]} : vector<512x8xf32> to vector<32x8xf32>
    %c0_26 = arith.constant 0 : index
    %c64 = arith.constant 64 : index
    %38 = vector.load %arg15[%c0_26, %c64] : memref<32x128xf32, #tpu.memory_space<vmem>>, vector<32x8xf32>
    tpu.vector_store %arg15[%c0_26, %c64], %37 {strides = array<i32>} : memref<32x128xf32, #tpu.memory_space<vmem>>, vector<32x8xf32>,
    %39 = vector.extract_strided_slice %20 {offsets = [288, 0], sizes = [32, 8], strides = [1, 1]} : vector<512x8xf32> to vector<32x8xf32>
    %c0_27 = arith.constant 0 : index
    %c72 = arith.constant 72 : index
    %40 = vector.load %arg15[%c0_27, %c72] : memref<32x128xf32, #tpu.memory_space<vmem>>, vector<32x8xf32>
    tpu.vector_store %arg15[%c0_27, %c72], %39 {strides = array<i32>} : memref<32x128xf32, #tpu.memory_space<vmem>>, vector<32x8xf32>,
    %41 = vector.extract_strided_slice %20 {offsets = [320, 0], sizes = [32, 8], strides = [1, 1]} : vector<512x8xf32> to vector<32x8xf32>
    %c0_28 = arith.constant 0 : index
    %c80 = arith.constant 80 : index
    %42 = vector.load %arg15[%c0_28, %c80] : memref<32x128xf32, #tpu.memory_space<vmem>>, vector<32x8xf32>
    tpu.vector_store %arg15[%c0_28, %c80], %41 {strides = array<i32>} : memref<32x128xf32, #tpu.memory_space<vmem>>, vector<32x8xf32>,
    %43 = vector.extract_strided_slice %20 {offsets = [352, 0], sizes = [32, 8], strides = [1, 1]} : vector<512x8xf32> to vector<32x8xf32>
    %c0_29 = arith.constant 0 : index
    %c88 = arith.constant 88 : index
    %44 = vector.load %arg15[%c0_29, %c88] : memref<32x128xf32, #tpu.memory_space<vmem>>, vector<32x8xf32>
    tpu.vector_store %arg15[%c0_29, %c88], %43 {strides = array<i32>} : memref<32x128xf32, #tpu.memory_space<vmem>>, vector<32x8xf32>,
    %45 = vector.extract_strided_slice %20 {offsets = [384, 0], sizes = [32, 8], strides = [1, 1]} : vector<512x8xf32> to vector<32x8xf32>
    %c0_30 = arith.constant 0 : index
    %c96 = arith.constant 96 : index
    %46 = vector.load %arg15[%c0_30, %c96] : memref<32x128xf32, #tpu.memory_space<vmem>>, vector<32x8xf32>
    tpu.vector_store %arg15[%c0_30, %c96], %45 {strides = array<i32>} : memref<32x128xf32, #tpu.memory_space<vmem>>, vector<32x8xf32>,
    %47 = vector.extract_strided_slice %20 {offsets = [416, 0], sizes = [32, 8], strides = [1, 1]} : vector<512x8xf32> to vector<32x8xf32>
    %c0_31 = arith.constant 0 : index
    %c104 = arith.constant 104 : index
    %48 = vector.load %arg15[%c0_31, %c104] : memref<32x128xf32, #tpu.memory_space<vmem>>, vector<32x8xf32>
    tpu.vector_store %arg15[%c0_31, %c104], %47 {strides = array<i32>} : memref<32x128xf32, #tpu.memory_space<vmem>>, vector<32x8xf32>,
    %49 = vector.extract_strided_slice %20 {offsets = [448, 0], sizes = [32, 8], strides = [1, 1]} : vector<512x8xf32> to vector<32x8xf32>
    %c0_32 = arith.constant 0 : index
    %c112 = arith.constant 112 : index
    %50 = vector.load %arg15[%c0_32, %c112] : memref<32x128xf32, #tpu.memory_space<vmem>>, vector<32x8xf32>
    tpu.vector_store %arg15[%c0_32, %c112], %49 {strides = array<i32>} : memref<32x128xf32, #tpu.memory_space<vmem>>, vector<32x8xf32>,
    %51 = vector.extract_strided_slice %20 {offsets = [480, 0], sizes = [32, 8], strides = [1, 1]} : vector<512x8xf32> to vector<32x8xf32>
    %c0_33 = arith.constant 0 : index
    %c120 = arith.constant 120 : index
    %52 = vector.load %arg15[%c0_33, %c120] : memref<32x128xf32, #tpu.memory_space<vmem>>, vector<32x8xf32>
    tpu.vector_store %arg15[%c0_33, %c120], %51 {strides = array<i32>} : memref<32x128xf32, #tpu.memory_space<vmem>>, vector<32x8xf32>,
    %c0_34 = arith.constant 0 : index
    %c0_35 = arith.constant 0 : index
    %53 = vector.load %arg8[%c0_34, %c0_35] : memref<64x32xf32, #tpu.memory_space<vmem>>, vector<64x32xf32>
    %c0_36 = arith.constant 0 : index
    %c0_37 = arith.constant 0 : index
    %54 = vector.load %arg15[%c0_36, %c0_37] : memref<32x128xf32, #tpu.memory_space<vmem>>, vector<32x128xf32>
    %cst_38 = arith.constant dense<0.000000e+00> : vector<64x128xf32>
    %55 = tpu.matmul %53, %54, %cst_38 {dimension_numbers = #tpu.dot_dimension_numbers<[1], [0], [0], [1], [0, 0, 1, 1], [], []>} : vector<64x32xf32>, vector<32x128xf32>, vector<64x128xf32> -> vector<64x128xf32>
    %c0_39 = arith.constant 0 : index
    %c0_40 = arith.constant 0 : index
    %56 = vector.load %arg9[%c0_39, %c0_40] : memref<64x1xf32, #tpu.memory_space<vmem>>, vector<64x1xf32>
    %57 = vector.broadcast %56 : vector<64x1xf32> to vector<64x128xf32>
    %58 = arith.addf %55, %57 : vector<64x128xf32>
    %cst_41 = arith.constant 0.000000e+00 : f32
    %59 = vector.broadcast %cst_41 : f32 to vector<64x128xf32>
    %60 = arith.maximumf %58, %59 : vector<64x128xf32>
    %61 = vector.extract_strided_slice %60 {offsets = [0, 0], sizes = [16, 128], strides = [1, 1]} : vector<64x128xf32> to vector<16x128xf32>
    %c0_42 = arith.constant 0 : index
    %c0_43 = arith.constant 0 : index
    %62 = vector.load %arg16[%c0_42, %c0_43] : memref<16x512xf32, #tpu.memory_space<vmem>>, vector<16x128xf32>
    tpu.vector_store %arg16[%c0_42, %c0_43], %61 {strides = array<i32>} : memref<16x512xf32, #tpu.memory_space<vmem>>, vector<16x128xf32>,
    %63 = vector.extract_strided_slice %60 {offsets = [16, 0], sizes = [16, 128], strides = [1, 1]} : vector<64x128xf32> to vector<16x128xf32>
    %c0_44 = arith.constant 0 : index
    %c128 = arith.constant 128 : index
    %64 = vector.load %arg16[%c0_44, %c128] : memref<16x512xf32, #tpu.memory_space<vmem>>, vector<16x128xf32>
    tpu.vector_store %arg16[%c0_44, %c128], %63 {strides = array<i32>} : memref<16x512xf32, #tpu.memory_space<vmem>>, vector<16x128xf32>,
    %65 = vector.extract_strided_slice %60 {offsets = [32, 0], sizes = [16, 128], strides = [1, 1]} : vector<64x128xf32> to vector<16x128xf32>
    %c0_45 = arith.constant 0 : index
    %c256 = arith.constant 256 : index
    %66 = vector.load %arg16[%c0_45, %c256] : memref<16x512xf32, #tpu.memory_space<vmem>>, vector<16x128xf32>
    tpu.vector_store %arg16[%c0_45, %c256], %65 {strides = array<i32>} : memref<16x512xf32, #tpu.memory_space<vmem>>, vector<16x128xf32>,
    %67 = vector.extract_strided_slice %60 {offsets = [48, 0], sizes = [16, 128], strides = [1, 1]} : vector<64x128xf32> to vector<16x128xf32>
    %c0_46 = arith.constant 0 : index
    %c384 = arith.constant 384 : index
    %68 = vector.load %arg16[%c0_46, %c384] : memref<16x512xf32, #tpu.memory_space<vmem>>, vector<16x128xf32>
    tpu.vector_store %arg16[%c0_46, %c384], %67 {strides = array<i32>} : memref<16x512xf32, #tpu.memory_space<vmem>>, vector<16x128xf32>,
    %c0_47 = arith.constant 0 : index
    %c0_48 = arith.constant 0 : index
    %69 = vector.load %arg10[%c0_47, %c0_48] : memref<32x16xf32, #tpu.memory_space<vmem>>, vector<32x16xf32>
    %c0_49 = arith.constant 0 : index
    %c0_50 = arith.constant 0 : index
    %70 = vector.load %arg16[%c0_49, %c0_50] : memref<16x512xf32, #tpu.memory_space<vmem>>, vector<16x512xf32>
    %cst_51 = arith.constant dense<0.000000e+00> : vector<32x512xf32>
    %71 = tpu.matmul %69, %70, %cst_51 {dimension_numbers = #tpu.dot_dimension_numbers<[1], [0], [0], [1], [0, 0, 1, 1], [], []>} : vector<32x16xf32>, vector<16x512xf32>, vector<32x512xf32> -> vector<32x512xf32>
    %c0_52 = arith.constant 0 : index
    %c0_53 = arith.constant 0 : index
    %72 = vector.load %arg11[%c0_52, %c0_53] : memref<32x1xf32, #tpu.memory_space<vmem>>, vector<32x1xf32>
    %73 = vector.broadcast %72 : vector<32x1xf32> to vector<32x512xf32>
    %74 = arith.addf %71, %73 : vector<32x512xf32>
    %cst_54 = arith.constant 0.000000e+00 : f32
    %75 = vector.broadcast %cst_54 : f32 to vector<32x512xf32>
    %76 = arith.maximumf %74, %75 : vector<32x512xf32>
    %c0_55 = arith.constant 0 : index
    %c0_56 = arith.constant 0 : index
    %77 = vector.load %arg12[%c0_55, %c0_56] : memref<12x8xf32, #tpu.memory_space<vmem>>, vector<12x8xf32>
    %78 = vector.extract_strided_slice %76 {offsets = [0, 0], sizes = [8, 512], strides = [1, 1]} : vector<32x512xf32> to vector<8x512xf32>
    %cst_57 = arith.constant dense<0.000000e+00> : vector<12x512xf32>
    %79 = tpu.matmul %77, %78, %cst_57 {dimension_numbers = #tpu.dot_dimension_numbers<[1], [0], [0], [1], [0, 0, 1, 1], [], []>} : vector<12x8xf32>, vector<8x512xf32>, vector<12x512xf32> -> vector<12x512xf32>
    %c0_58 = arith.constant 0 : index
    %c0_59 = arith.constant 0 : index
    %80 = vector.load %arg13[%c0_58, %c0_59] : memref<12x1xf32, #tpu.memory_space<vmem>>, vector<12x1xf32>
    %81 = vector.broadcast %80 : vector<12x1xf32> to vector<12x512xf32>
    %82 = arith.addf %79, %81 : vector<12x512xf32>
    %c0_60 = arith.constant 0 : index
    %c0_61 = arith.constant 0 : index
    %c0_62 = arith.constant 0 : index
    %83 = vector.load %arg14[%c0_60, %c0_61, %c0_62] : memref<4x12x512xf32, #tpu.memory_space<vmem>>, vector<1x12x512xf32>
    %84 = vector.shape_cast %83 : vector<1x12x512xf32> to vector<12x512xf32>
    %85 = vector.shape_cast %82 : vector<12x512xf32> to vector<1x12x512xf32>
    tpu.vector_store %arg14[%c0_60, %c0_61, %c0_62], %85 {strides = array<i32>} : memref<4x12x512xf32, #tpu.memory_space<vmem>>, vector<1x12x512xf32>,
    %c0_63 = arith.constant 0 : index
    %c0_64 = arith.constant 0 : index
    %86 = vector.load %arg12[%c0_63, %c0_64] : memref<12x8xf32, #tpu.memory_space<vmem>>, vector<12x8xf32>
    %87 = vector.extract_strided_slice %76 {offsets = [8, 0], sizes = [8, 512], strides = [1, 1]} : vector<32x512xf32> to vector<8x512xf32>
    %cst_65 = arith.constant dense<0.000000e+00> : vector<12x512xf32>
    %88 = tpu.matmul %86, %87, %cst_65 {dimension_numbers = #tpu.dot_dimension_numbers<[1], [0], [0], [1], [0, 0, 1, 1], [], []>} : vector<12x8xf32>, vector<8x512xf32>, vector<12x512xf32> -> vector<12x512xf32>
    %c0_66 = arith.constant 0 : index
    %c0_67 = arith.constant 0 : index
    %89 = vector.load %arg13[%c0_66, %c0_67] : memref<12x1xf32, #tpu.memory_space<vmem>>, vector<12x1xf32>
    %90 = vector.broadcast %89 : vector<12x1xf32> to vector<12x512xf32>
    %91 = arith.addf %88, %90 : vector<12x512xf32>
    %c1 = arith.constant 1 : index
    %c0_68 = arith.constant 0 : index
    %c0_69 = arith.constant 0 : index
    %92 = vector.load %arg14[%c1, %c0_68, %c0_69] : memref<4x12x512xf32, #tpu.memory_space<vmem>>, vector<1x12x512xf32>
    %93 = vector.shape_cast %92 : vector<1x12x512xf32> to vector<12x512xf32>
    %94 = vector.shape_cast %91 : vector<12x512xf32> to vector<1x12x512xf32>
    tpu.vector_store %arg14[%c1, %c0_68, %c0_69], %94 {strides = array<i32>} : memref<4x12x512xf32, #tpu.memory_space<vmem>>, vector<1x12x512xf32>,
    %c0_70 = arith.constant 0 : index
    %c0_71 = arith.constant 0 : index
    %95 = vector.load %arg12[%c0_70, %c0_71] : memref<12x8xf32, #tpu.memory_space<vmem>>, vector<12x8xf32>
    %96 = vector.extract_strided_slice %76 {offsets = [16, 0], sizes = [8, 512], strides = [1, 1]} : vector<32x512xf32> to vector<8x512xf32>
    %cst_72 = arith.constant dense<0.000000e+00> : vector<12x512xf32>
    %97 = tpu.matmul %95, %96, %cst_72 {dimension_numbers = #tpu.dot_dimension_numbers<[1], [0], [0], [1], [0, 0, 1, 1], [], []>} : vector<12x8xf32>, vector<8x512xf32>, vector<12x512xf32> -> vector<12x512xf32>
    %c0_73 = arith.constant 0 : index
    %c0_74 = arith.constant 0 : index
    %98 = vector.load %arg13[%c0_73, %c0_74] : memref<12x1xf32, #tpu.memory_space<vmem>>, vector<12x1xf32>
    %99 = vector.broadcast %98 : vector<12x1xf32> to vector<12x512xf32>
    %100 = arith.addf %97, %99 : vector<12x512xf32>
    %c2 = arith.constant 2 : index
    %c0_75 = arith.constant 0 : index
    %c0_76 = arith.constant 0 : index
    %101 = vector.load %arg14[%c2, %c0_75, %c0_76] : memref<4x12x512xf32, #tpu.memory_space<vmem>>, vector<1x12x512xf32>
    %102 = vector.shape_cast %101 : vector<1x12x512xf32> to vector<12x512xf32>
    %103 = vector.shape_cast %100 : vector<12x512xf32> to vector<1x12x512xf32>
    tpu.vector_store %arg14[%c2, %c0_75, %c0_76], %103 {strides = array<i32>} : memref<4x12x512xf32, #tpu.memory_space<vmem>>, vector<1x12x512xf32>,
    %c0_77 = arith.constant 0 : index
    %c0_78 = arith.constant 0 : index
    %104 = vector.load %arg12[%c0_77, %c0_78] : memref<12x8xf32, #tpu.memory_space<vmem>>, vector<12x8xf32>
    %105 = vector.extract_strided_slice %76 {offsets = [24, 0], sizes = [8, 512], strides = [1, 1]} : vector<32x512xf32> to vector<8x512xf32>
    %cst_79 = arith.constant dense<0.000000e+00> : vector<12x512xf32>
    %106 = tpu.matmul %104, %105, %cst_79 {dimension_numbers = #tpu.dot_dimension_numbers<[1], [0], [0], [1], [0, 0, 1, 1], [], []>} : vector<12x8xf32>, vector<8x512xf32>, vector<12x512xf32> -> vector<12x512xf32>
    %c0_80 = arith.constant 0 : index
    %c0_81 = arith.constant 0 : index
    %107 = vector.load %arg13[%c0_80, %c0_81] : memref<12x1xf32, #tpu.memory_space<vmem>>, vector<12x1xf32>
    %108 = vector.broadcast %107 : vector<12x1xf32> to vector<12x512xf32>
    %109 = arith.addf %106, %108 : vector<12x512xf32>
    %c3 = arith.constant 3 : index
    %c0_82 = arith.constant 0 : index
    %c0_83 = arith.constant 0 : index
    %110 = vector.load %arg14[%c3, %c0_82, %c0_83] : memref<4x12x512xf32, #tpu.memory_space<vmem>>, vector<1x12x512xf32>
    %111 = vector.shape_cast %110 : vector<1x12x512xf32> to vector<12x512xf32>
    %112 = vector.shape_cast %109 : vector<12x512xf32> to vector<1x12x512xf32>
    tpu.vector_store %arg14[%c3, %c0_82, %c0_83], %112 {strides = array<i32>} : memref<4x12x512xf32, #tpu.memory_space<vmem>>, vector<1x12x512xf32>,
    return
  }
  func.func @transform_0(%arg0: i32) -> (i32, i32) {
    %c0_i32 = arith.constant 0 : i32
    %c0_i32_0 = arith.constant 0 : i32
    return %c0_i32, %arg0 : i32, i32
  }
  func.func @transform_1(%arg0: i32) -> (i32, i32) {
    %c0_i32 = arith.constant 0 : i32
    %c0_i32_0 = arith.constant 0 : i32
    %c0_i32_1 = arith.constant 0 : i32
    return %c0_i32, %c0_i32_0 : i32, i32
  }
  func.func @transform_2(%arg0: i32) -> (i32, i32) {
    %c0_i32 = arith.constant 0 : i32
    %c0_i32_0 = arith.constant 0 : i32
    %c0_i32_1 = arith.constant 0 : i32
    return %c0_i32, %c0_i32_0 : i32, i32
  }
  func.func @transform_3(%arg0: i32) -> (i32, i32) {
    %c0_i32 = arith.constant 0 : i32
    %c0_i32_0 = arith.constant 0 : i32
    %c0_i32_1 = arith.constant 0 : i32
    return %c0_i32, %c0_i32_0 : i32, i32
  }
  func.func @transform_4(%arg0: i32) -> (i32, i32) {
    %c0_i32 = arith.constant 0 : i32
    %c0_i32_0 = arith.constant 0 : i32
    %c0_i32_1 = arith.constant 0 : i32
    return %c0_i32, %c0_i32_0 : i32, i32
  }
  func.func @transform_5(%arg0: i32) -> (i32, i32) {
    %c0_i32 = arith.constant 0 : i32
    %c0_i32_0 = arith.constant 0 : i32
    %c0_i32_1 = arith.constant 0 : i32
    return %c0_i32, %c0_i32_0 : i32, i32
  }
  func.func @transform_6(%arg0: i32) -> (i32, i32) {
    %c0_i32 = arith.constant 0 : i32
    %c0_i32_0 = arith.constant 0 : i32
    %c0_i32_1 = arith.constant 0 : i32
    return %c0_i32, %c0_i32_0 : i32, i32
  }
  func.func @transform_7(%arg0: i32) -> (i32, i32) {
    %c0_i32 = arith.constant 0 : i32
    %c0_i32_0 = arith.constant 0 : i32
    %c0_i32_1 = arith.constant 0 : i32
    return %c0_i32, %c0_i32_0 : i32, i32
  }
  func.func @transform_8(%arg0: i32) -> (i32, i32) {
    %c0_i32 = arith.constant 0 : i32
    %c0_i32_0 = arith.constant 0 : i32
    %c0_i32_1 = arith.constant 0 : i32
    return %c0_i32, %c0_i32_0 : i32, i32
  }
  func.func @transform_9(%arg0: i32) -> (i32, i32) {
    %c0_i32 = arith.constant 0 : i32
    %c0_i32_0 = arith.constant 0 : i32
    %c0_i32_1 = arith.constant 0 : i32
    return %c0_i32, %c0_i32_0 : i32, i32
  }
  func.func @transform_10(%arg0: i32) -> (i32, i32) {
    %c0_i32 = arith.constant 0 : i32
    %c0_i32_0 = arith.constant 0 : i32
    %c0_i32_1 = arith.constant 0 : i32
    return %c0_i32, %c0_i32_0 : i32, i32
  }
  func.func @transform_11(%arg0: i32) -> (i32, i32) {
    %c0_i32 = arith.constant 0 : i32
    %c0_i32_0 = arith.constant 0 : i32
    %c0_i32_1 = arith.constant 0 : i32
    return %c0_i32, %c0_i32_0 : i32, i32
  }
  func.func @transform_12(%arg0: i32) -> (i32, i32) {
    %c0_i32 = arith.constant 0 : i32
    %c0_i32_0 = arith.constant 0 : i32
    %c0_i32_1 = arith.constant 0 : i32
    return %c0_i32, %c0_i32_0 : i32, i32
  }
  func.func @transform_13(%arg0: i32) -> (i32, i32, i32) {
    %c0_i32 = arith.constant 0 : i32
    %c0_i32_0 = arith.constant 0 : i32
    %c0_i32_1 = arith.constant 0 : i32
    return %c0_i32, %c0_i32_0, %arg0 : i32, i32, i32
  }
}

</mosaic_0001>

<llo_original>
// kernel: decoder_forward.1
$region0: #{decoder_forward.1}
  #allocation0 [shape = 'u32[]', space=smem, size = 0x4, offset = 0x4, fixed_abs, tag = 'smem constant byte address 0x4 - core index']
  #allocation1 [shape = 'u32[72,128]{1,0:T(1,128)}', space=vmem, size = 0x9000, scoped, tag = 'internal scratch']
  #allocation2 [shape = 'f32[32,128]{1,0:T(8,128)}', space=vmem, size = 0x4000, scoped, tag = 'scratch operand']
  #allocation3 [shape = 'f32[16,512]{1,0:T(8,128)}', space=vmem, size = 0x8000, scoped, tag = 'scratch operand']
  %s0 = inlined_call_operand.vmem [shape: f32[16,8], index: 0, kind: input, shape index: {}]
  %s1 = inlined_call_operand.vmem [shape: f32[64,16], index: 1, kind: input, shape index: {}]
  %s2 = inlined_call_operand.vmem [shape: f32[64,1], index: 2, kind: input, shape index: {}]
  %s3 = inlined_call_operand.hbm [shape: f32[64,64], index: 3, kind: input, shape index: {}]
  %s4 = inlined_call_operand.vmem [shape: f32[64,1], index: 4, kind: input, shape index: {}]
  %s5 = inlined_call_operand.vmem [shape: f32[512,64], index: 5, kind: input, shape index: {}]
  %s6 = inlined_call_operand.vmem [shape: f32[512,1], index: 6, kind: input, shape index: {}]
  %s7 = inlined_call_operand.vmem [shape: f32[64,32], index: 7, kind: input, shape index: {}]
  %s8 = inlined_call_operand.vmem [shape: f32[64,1], index: 8, kind: input, shape index: {}]
  %s9 = inlined_call_operand.vmem [shape: f32[32,16], index: 9, kind: input, shape index: {}]
  %s10 = inlined_call_operand.vmem [shape: f32[32,1], index: 10, kind: input, shape index: {}]
  %s11 = inlined_call_operand.vmem [shape: f32[12,8], index: 11, kind: input, shape index: {}]
  %s12 = inlined_call_operand.vmem [shape: f32[12,1], index: 12, kind: input, shape index: {}]
  %s13 = inlined_call_operand.vmem [shape: f32[4,12,512], index: 13, kind: output, shape index: {}]
  %s14 = sld [smem:[#allocation0]]
  $region66: #{decoder_forward.1} parent=0
    _
  %s16 = ssub.s32 1, %s14
  %s17 = scalar_select 0, %s16, %s14
  $region1: #{decoder_forward.1} parent=0
    #allocation4 [shape = 'u8[32768]{0}', space=vmem, size = 0x8000, scoped, tag = 'input window, operand 3, single buffered']
    #allocation5 [shape = 's32[1]{0}', space=sflag, size = 0x4, scoped, tag = 'scoped memory for decoder_forward.1']
    %18 = vsyncpa [#allocation5], 0
    // Predicated region
    $region2: #{decoder_forward.1} parent=1 // pred_check
      _
    $region3: #{decoder_forward.1} parent=1 // pred_check_branch
      %20 = sbr.rel (0) target = $region5
    $region4: #{decoder_forward.1} parent=1 // pred_region
      _
    $region5: #{decoder_forward.1} parent=1 // pred_fallthru
      _
    // Predicated region
    $region6: #{decoder_forward.1} parent=1 // pred_check
      _
    $region7: #{decoder_forward.1} parent=1 // pred_check_branch
      %22 = sbr.rel (0) target = $region9
    $region8: #{decoder_forward.1} parent=1 // pred_region
      _
    $region9: #{decoder_forward.1} parent=1 // pred_fallthru
      _
    // Predicated region
    $region10: #{decoder_forward.1} parent=1 // pred_check
      _
    $region11: #{decoder_forward.1} parent=1 // pred_check_branch
      %24 = sbr.rel (0) target = $region13
    $region12: #{decoder_forward.1} parent=1 // pred_region
      _
    $region13: #{decoder_forward.1} parent=1 // pred_fallthru
      _
    // Predicated region
    $region14: #{decoder_forward.1} parent=1 // pred_check
      _
    $region15: #{decoder_forward.1} parent=1 // pred_check_branch
      %26 = sbr.rel (0) target = $region17
    $region16: #{decoder_forward.1} parent=1 // pred_region
      %28 = vsyncadd [#allocation5], 0
      %s29 = sshll.u32 %s3, 4
      %s30 = int_to_ptr.hbm [resolvable:$true] %s29
      %s31 = sshll.u32 [#allocation4], 4
      %s32 = int_to_ptr.vmem [resolvable:$true] %s31
      %37 = dma.hbm_to_vmem [thread:$0]  %s30, 1024, %s32, [#allocation5], 128, 128, 8
    $region17: #{decoder_forward.1} parent=1 // pred_fallthru
      _
    // Predicated region
    $region18: #{decoder_forward.1} parent=1 // pred_check
      _
    $region19: #{decoder_forward.1} parent=1 // pred_check_branch
      %39 = sbr.rel (0) target = $region21
    $region20: #{decoder_forward.1} parent=1 // pred_region
      _
    $region21: #{decoder_forward.1} parent=1 // pred_fallthru
      _
    // Predicated region
    $region22: #{decoder_forward.1} parent=1 // pred_check
      _
    $region23: #{decoder_forward.1} parent=1 // pred_check_branch
      %41 = sbr.rel (0) target = $region25
    $region24: #{decoder_forward.1} parent=1 // pred_region
      _
    $region25: #{decoder_forward.1} parent=1 // pred_fallthru
      _
    // Predicated region
    $region26: #{decoder_forward.1} parent=1 // pred_check
      _
    $region27: #{decoder_forward.1} parent=1 // pred_check_branch
      %43 = sbr.rel (0) target = $region29
    $region28: #{decoder_forward.1} parent=1 // pred_region
      _
    $region29: #{decoder_forward.1} parent=1 // pred_fallthru
      _
    // Predicated region
    $region30: #{decoder_forward.1} parent=1 // pred_check
      _
    $region31: #{decoder_forward.1} parent=1 // pred_check_branch
      %45 = sbr.rel (0) target = $region33
    $region32: #{decoder_forward.1} parent=1 // pred_region
      _
    $region33: #{decoder_forward.1} parent=1 // pred_fallthru
      _
    // Predicated region
    $region34: #{decoder_forward.1} parent=1 // pred_check
      _
    $region35: #{decoder_forward.1} parent=1 // pred_check_branch
      %47 = sbr.rel (0) target = $region37
    $region36: #{decoder_forward.1} parent=1 // pred_region
      _
    $region37: #{decoder_forward.1} parent=1 // pred_fallthru
      _
    // Predicated region
    $region38: #{decoder_forward.1} parent=1 // pred_check
      _
    $region39: #{decoder_forward.1} parent=1 // pred_check_branch
      %49 = sbr.rel (0) target = $region41
    $region40: #{decoder_forward.1} parent=1 // pred_region
      _
    $region41: #{decoder_forward.1} parent=1 // pred_fallthru
      _
    // Predicated region
    $region42: #{decoder_forward.1} parent=1 // pred_check
      _
    $region43: #{decoder_forward.1} parent=1 // pred_check_branch
      %51 = sbr.rel (0) target = $region45
    $region44: #{decoder_forward.1} parent=1 // pred_region
      _
    $region45: #{decoder_forward.1} parent=1 // pred_fallthru
      _
    // Predicated region
    $region46: #{decoder_forward.1} parent=1 // pred_check
      _
    $region47: #{decoder_forward.1} parent=1 // pred_check_branch
      %53 = sbr.rel (0) target = $region49
    $region48: #{decoder_forward.1} parent=1 // pred_region
      _
    $region49: #{decoder_forward.1} parent=1 // pred_fallthru
      _
    // Predicated region
    $region50: #{decoder_forward.1} parent=1 // pred_check
      _
    $region51: #{decoder_forward.1} parent=1 // pred_check_branch
      %55 = sbr.rel (0) target = $region53
    $region52: #{decoder_forward.1} parent=1 // pred_region
      _
    $region53: #{decoder_forward.1} parent=1 // pred_fallthru
      _
    // Predicated region
    $region54: #{decoder_forward.1} parent=1 // pred_check
      _
    $region55: #{decoder_forward.1} parent=1 // pred_check_branch
      %57 = sbr.rel (0) target = $region57
    $region56: #{decoder_forward.1} parent=1 // pred_region
      %59 = dma.done [#allocation5], 1024
    $region57: #{decoder_forward.1} parent=1 // pred_fallthru
      _
    %v60 = vld [vmem:[%s0] sm:$0xff]
    %v61 = vld [vmem:[%s0 + $0x8] sm:$0xff]
    %v62 = vld [vmem:[%s1] sm:$0xff]
    %v63 = vld [vmem:[%s1 + $0x8] sm:$0xff]
    %v64 = vld [vmem:[%s1 + $0x10] sm:$0xff]
    %v65 = vld [vmem:[%s1 + $0x18] sm:$0xff]
    %v66 = vld [vmem:[%s1 + $0x20] sm:$0xff]
    %v67 = vld [vmem:[%s1 + $0x28] sm:$0xff]
    %v68 = vld [vmem:[%s1 + $0x30] sm:$0xff]
    %v69 = vld [vmem:[%s1 + $0x38] sm:$0xff]
    %v70 = vld [vmem:[%s2] sm:$0xff]
    %v71 = vld [vmem:[%s2 + $0x8] sm:$0xff]
    %v72 = vld [vmem:[%s2 + $0x10] sm:$0xff]
    %v73 = vld [vmem:[%s2 + $0x18] sm:$0xff]
    %v74 = vld [vmem:[%s2 + $0x20] sm:$0xff]
    %v75 = vld [vmem:[%s2 + $0x28] sm:$0xff]
    %v76 = vld [vmem:[%s2 + $0x30] sm:$0xff]
    %v77 = vld [vmem:[%s2 + $0x38] sm:$0xff]
    %79 = vset.pattern.permute.xlu0 0
    %80 = vperm.xlu0 %79, %v70
    %v81 = vpop.permute.xlu0 %80
    %84 = vset.pattern.permute.xlu0 0
    %85 = vperm.xlu0 %84, %v71
    %v86 = vpop.permute.xlu0 %85
    %89 = vset.pattern.permute.xlu0 0
    %90 = vperm.xlu0 %89, %v72
    %v91 = vpop.permute.xlu0 %90
    %94 = vset.pattern.permute.xlu0 0
    %95 = vperm.xlu0 %94, %v73
    %v96 = vpop.permute.xlu0 %95
    %99 = vset.pattern.permute.xlu0 0
    %100 = vperm.xlu0 %99, %v74
    %v101 = vpop.permute.xlu0 %100
    %104 = vset.pattern.permute.xlu0 0
    %105 = vperm.xlu0 %104, %v75
    %v106 = vpop.permute.xlu0 %105
    %109 = vset.pattern.permute.xlu0 0
    %110 = vperm.xlu0 %109, %v76
    %v111 = vpop.permute.xlu0 %110
    %114 = vset.pattern.permute.xlu0 0
    %115 = vperm.xlu0 %114, %v77
    %v116 = vpop.permute.xlu0 %115
    %vm118 = vcmask 130048
    %v120 = vsel %vm118, %v62, 0
    %v123 = vsel %vm118, %v63, 0
    %v126 = vsel %vm118, %v64, 0
    %v129 = vsel %vm118, %v65, 0
    %v132 = vsel %vm118, %v66, 0
    %v135 = vsel %vm118, %v67, 0
    %v138 = vsel %vm118, %v68, 0
    %v141 = vsel %vm118, %v69, 0
    %143 = vmatpush.msra.mxu0 0.0
    %144 = vmatpush.msra.mxu0 0.0
    %145 = vmatpush.msra.mxu0 0.0
    %146 = vmatpush.msra.mxu0 0.0
    %147 = vmatpush.msra.mxu0 0.0
    %148 = vmatpush.msra.mxu0 0.0
    %149 = vmatpush.msra.mxu0 0.0
    %150 = vmatpush.msra.mxu0 0.0
    %151 = vmatpush.msra.mxu0 0.0
    %152 = vmatpush.msra.mxu0 0.0
    %153 = vmatpush.msra.mxu0 0.0
    %154 = vmatpush.msra.mxu0 0.0
    %155 = vmatpush.msra.mxu0 0.0
    %156 = vmatpush.msra.mxu0 0.0
    %157 = vmatpush.msra.mxu0 %v61
    %158 = vmatpush.msra.mxu0 %v60
    %159 = vmatmul.f32.gmra.mxu0 %v120
    %v160 = vpop.f32.mrf.mxu0
    %v161 = vadd.f32 %v81, %v160
    %162 = vmatmul.f32.gmra.mxu0 %v123
    %v163 = vpop.f32.mrf.mxu0
    %v164 = vadd.f32 %v86, %v163
    %165 = vmatmul.f32.gmra.mxu0 %v126
    %v166 = vpop.f32.mrf.mxu0
    %v167 = vadd.f32 %v91, %v166
    %168 = vmatmul.f32.gmra.mxu0 %v129
    %v169 = vpop.f32.mrf.mxu0
    %v170 = vadd.f32 %v96, %v169
    %171 = vmatmul.f32.gmra.mxu0 %v132
    %v172 = vpop.f32.mrf.mxu0
    %v173 = vadd.f32 %v101, %v172
    %174 = vmatmul.f32.gmra.mxu0 %v135
    %v175 = vpop.f32.mrf.mxu0
    %v176 = vadd.f32 %v106, %v175
    %177 = vmatmul.f32.gmra.mxu0 %v138
    %v178 = vpop.f32.mrf.mxu0
    %v179 = vadd.f32 %v111, %v178
    %180 = vmatmul.f32.gmra.mxu0 %v141
    %v181 = vpop.f32.mrf.mxu0
    %v182 = vadd.f32 %v116, %v181
    %183 = vdwg.mxu0
    %v184 = vmax.f32 %v161, 0.0
    %v185 = vmax.f32 %v164, 0.0
    %v186 = vmax.f32 %v167, 0.0
    %v187 = vmax.f32 %v170, 0.0
    %v188 = vmax.f32 %v173, 0.0
    %v189 = vmax.f32 %v176, 0.0
    %v190 = vmax.f32 %v179, 0.0
    %v191 = vmax.f32 %v182, 0.0
    %v192 = vld [vmem:[#allocation4] sm:$0xff]
    %v193 = vld [vmem:[#allocation4 + $0x8] sm:$0xff]
    %v194 = vld [vmem:[#allocation4 + $0x10] sm:$0xff]
    %v195 = vld [vmem:[#allocation4 + $0x18] sm:$0xff]
    %v196 = vld [vmem:[#allocation4 + $0x20] sm:$0xff]
    %v197 = vld [vmem:[#allocation4 + $0x28] sm:$0xff]
    %v198 = vld [vmem:[#allocation4 + $0x30] sm:$0xff]
    %v199 = vld [vmem:[#allocation4 + $0x38] sm:$0xff]
    %v200 = vld [vmem:[%s4] sm:$0xff]
    %v201 = vld [vmem:[%s4 + $0x8] sm:$0xff]
    %v202 = vld [vmem:[%s4 + $0x10] sm:$0xff]
    %v203 = vld [vmem:[%s4 + $0x18] sm:$0xff]
    %v204 = vld [vmem:[%s4 + $0x20] sm:$0xff]
    %v205 = vld [vmem:[%s4 + $0x28] sm:$0xff]
    %v206 = vld [vmem:[%s4 + $0x30] sm:$0xff]
    %v207 = vld [vmem:[%s4 + $0x38] sm:$0xff]
    %209 = vset.pattern.permute.xlu0 0
    %210 = vperm.xlu0 %209, %v200
    %v211 = vpop.permute.xlu0 %210
    %214 = vset.pattern.permute.xlu0 0
    %215 = vperm.xlu0 %214, %v201
    %v216 = vpop.permute.xlu0 %215
    %219 = vset.pattern.permute.xlu0 0
    %220 = vperm.xlu0 %219, %v202
    %v221 = vpop.permute.xlu0 %220
    %224 = vset.pattern.permute.xlu0 0
    %225 = vperm.xlu0 %224, %v203
    %v226 = vpop.permute.xlu0 %225
    %229 = vset.pattern.permute.xlu0 0
    %230 = vperm.xlu0 %229, %v204
    %v231 = vpop.permute.xlu0 %230
    %234 = vset.pattern.permute.xlu0 0
    %235 = vperm.xlu0 %234, %v205
    %v236 = vpop.permute.xlu0 %235
    %239 = vset.pattern.permute.xlu0 0
    %240 = vperm.xlu0 %239, %v206
    %v241 = vpop.permute.xlu0 %240
    %244 = vset.pattern.permute.xlu0 0
    %245 = vperm.xlu0 %244, %v207
    %v246 = vpop.permute.xlu0 %245
    %vm248 = vcmask 523264
    %v250 = vsel %vm248, %v192, 0
    %v253 = vsel %vm248, %v193, 0
    %v256 = vsel %vm248, %v194, 0
    %v259 = vsel %vm248, %v195, 0
    %v262 = vsel %vm248, %v196, 0
    %v265 = vsel %vm248, %v197, 0
    %v268 = vsel %vm248, %v198, 0
    %v271 = vsel %vm248, %v199, 0
    %273 = vmatpush.msra.mxu0 0.0
    %274 = vmatpush.msra.mxu0 0.0
    %275 = vmatpush.msra.mxu0 0.0
    %276 = vmatpush.msra.mxu0 0.0
    %277 = vmatpush.msra.mxu0 0.0
    %278 = vmatpush.msra.mxu0 0.0
    %279 = vmatpush.msra.mxu0 0.0
    %280 = vmatpush.msra.mxu0 0.0
    %281 = vmatpush.msra.mxu0 %v191
    %282 = vmatpush.msra.mxu0 %v190
    %283 = vmatpush.msra.mxu0 %v189
    %284 = vmatpush.msra.mxu0 %v188
    %285 = vmatpush.msra.mxu0 %v187
    %286 = vmatpush.msra.mxu0 %v186
    %287 = vmatpush.msra.mxu0 %v185
    %288 = vmatpush.msra.mxu0 %v184
    %289 = vmatmul.f32.gmra.mxu0 %v250
    %v290 = vpop.f32.mrf.mxu0
    %v291 = vadd.f32 %v211, %v290
    %292 = vmatmul.f32.gmra.mxu0 %v253
    %v293 = vpop.f32.mrf.mxu0
    %v294 = vadd.f32 %v216, %v293
    %295 = vmatmul.f32.gmra.mxu0 %v256
    %v296 = vpop.f32.mrf.mxu0
    %v297 = vadd.f32 %v221, %v296
    %298 = vmatmul.f32.gmra.mxu0 %v259
    %v299 = vpop.f32.mrf.mxu0
    %v300 = vadd.f32 %v226, %v299
    %301 = vmatmul.f32.gmra.mxu0 %v262
    %v302 = vpop.f32.mrf.mxu0
    %v303 = vadd.f32 %v231, %v302
    %304 = vmatmul.f32.gmra.mxu0 %v265
    %v305 = vpop.f32.mrf.mxu0
    %v306 = vadd.f32 %v236, %v305
    %307 = vmatmul.f32.gmra.mxu0 %v268
    %v308 = vpop.f32.mrf.mxu0
    %v309 = vadd.f32 %v241, %v308
    %310 = vmatmul.f32.gmra.mxu0 %v271
    %v311 = vpop.f32.mrf.mxu0
    %v312 = vadd.f32 %v246, %v311
    %313 = vdwg.mxu0
    %v314 = vmax.f32 %v291, 0.0
    %v315 = vmax.f32 %v294, 0.0
    %v316 = vmax.f32 %v297, 0.0
    %v317 = vmax.f32 %v300, 0.0
    %v318 = vmax.f32 %v303, 0.0
    %v319 = vmax.f32 %v306, 0.0
    %v320 = vmax.f32 %v309, 0.0
    %v321 = vmax.f32 %v312, 0.0
    %v322 = vadd.f32 %v314, %v184
    %v323 = vadd.f32 %v315, %v185
    %v324 = vadd.f32 %v316, %v186
    %v325 = vadd.f32 %v317, %v187
    %v326 = vadd.f32 %v318, %v188
    %v327 = vadd.f32 %v319, %v189
    %v328 = vadd.f32 %v320, %v190
    %v329 = vadd.f32 %v321, %v191
    %v330 = vld [vmem:[%s5] sm:$0xff]
    %v331 = vld [vmem:[%s5 + $0x8] sm:$0xff]
    %v332 = vld [vmem:[%s5 + $0x10] sm:$0xff]
    %v333 = vld [vmem:[%s5 + $0x18] sm:$0xff]
    %v334 = vld [vmem:[%s5 + $0x20] sm:$0xff]
    %v335 = vld [vmem:[%s5 + $0x28] sm:$0xff]
    %v336 = vld [vmem:[%s5 + $0x30] sm:$0xff]
    %v337 = vld [vmem:[%s5 + $0x38] sm:$0xff]
    %v338 = vld [vmem:[%s5 + $0x40] sm:$0xff]
    %v339 = vld [vmem:[%s5 + $0x48] sm:$0xff]
    %v340 = vld [vmem:[%s5 + $0x50] sm:$0xff]
    %v341 = vld [vmem:[%s5 + $0x58] sm:$0xff]
    %v342 = vld [vmem:[%s5 + $0x60] sm:$0xff]
    %v343 = vld [vmem:[%s5 + $0x68] sm:$0xff]
    %v344 = vld [vmem:[%s5 + $0x70] sm:$0xff]
    %v345 = vld [vmem:[%s5 + $0x78] sm:$0xff]
    %v346 = vld [vmem:[%s5 + $0x80] sm:$0xff]
    %v347 = vld [vmem:[%s5 + $0x88] sm:$0xff]
    %v348 = vld [vmem:[%s5 + $0x90] sm:$0xff]
    %v349 = vld [vmem:[%s5 + $0x98] sm:$0xff]
    %v350 = vld [vmem:[%s5 + $0xa0] sm:$0xff]
    %v351 = vld [vmem:[%s5 + $0xa8] sm:$0xff]
    %v352 = vld [vmem:[%s5 + $0xb0] sm:$0xff]
    %v353 = vld [vmem:[%s5 + $0xb8] sm:$0xff]
    %v354 = vld [vmem:[%s5 + $0xc0] sm:$0xff]
    %v355 = vld [vmem:[%s5 + $0xc8] sm:$0xff]
    %v356 = vld [vmem:[%s5 + $0xd0] sm:$0xff]
    %v357 = vld [vmem:[%s5 + $0xd8] sm:$0xff]
    %v358 = vld [vmem:[%s5 + $0xe0] sm:$0xff]
    %v359 = vld [vmem:[%s5 + $0xe8] sm:$0xff]
    %v360 = vld [vmem:[%s5 + $0xf0] sm:$0xff]
    %v361 = vld [vmem:[%s5 + $0xf8] sm:$0xff]
    %v362 = vld [vmem:[%s5 + $0x100] sm:$0xff]
    %v363 = vld [vmem:[%s5 + $0x108] sm:$0xff]
    %v364 = vld [vmem:[%s5 + $0x110] sm:$0xff]
    %v365 = vld [vmem:[%s5 + $0x118] sm:$0xff]
    %v366 = vld [vmem:[%s5 + $0x120] sm:$0xff]
    %v367 = vld [vmem:[%s5 + $0x128] sm:$0xff]
    %v368 = vld [vmem:[%s5 + $0x130] sm:$0xff]
    %v369 = vld [vmem:[%s5 + $0x138] sm:$0xff]
    %v370 = vld [vmem:[%s5 + $0x140] sm:$0xff]
    %v371 = vld [vmem:[%s5 + $0x148] sm:$0xff]
    %v372 = vld [vmem:[%s5 + $0x150] sm:$0xff]
    %v373 = vld [vmem:[%s5 + $0x158] sm:$0xff]
    %v374 = vld [vmem:[%s5 + $0x160] sm:$0xff]
    %v375 = vld [vmem:[%s5 + $0x168] sm:$0xff]
    %v376 = vld [vmem:[%s5 + $0x170] sm:$0xff]
    %v377 = vld [vmem:[%s5 + $0x178] sm:$0xff]
    %v378 = vld [vmem:[%s5 + $0x180] sm:$0xff]
    %v379 = vld [vmem:[%s5 + $0x188] sm:$0xff]
    %v380 = vld [vmem:[%s5 + $0x190] sm:$0xff]
    %v381 = vld [vmem:[%s5 + $0x198] sm:$0xff]
    %v382 = vld [vmem:[%s5 + $0x1a0] sm:$0xff]
    %v383 = vld [vmem:[%s5 + $0x1a8] sm:$0xff]
    %v384 = vld [vmem:[%s5 + $0x1b0] sm:$0xff]
    %v385 = vld [vmem:[%s5 + $0x1b8] sm:$0xff]
    %v386 = vld [vmem:[%s5 + $0x1c0] sm:$0xff]
    %v387 = vld [vmem:[%s5 + $0x1c8] sm:$0xff]
    %v388 = vld [vmem:[%s5 + $0x1d0] sm:$0xff]
    %v389 = vld [vmem:[%s5 + $0x1d8] sm:$0xff]
    %v390 = vld [vmem:[%s5 + $0x1e0] sm:$0xff]
    %v391 = vld [vmem:[%s5 + $0x1e8] sm:$0xff]
    %v392 = vld [vmem:[%s5 + $0x1f0] sm:$0xff]
    %v393 = vld [vmem:[%s5 + $0x1f8] sm:$0xff]
    %v394 = vld [vmem:[%s6] sm:$0xff]
    %v395 = vld [vmem:[%s6 + $0x8] sm:$0xff]
    %v396 = vld [vmem:[%s6 + $0x10] sm:$0xff]
    %v397 = vld [vmem:[%s6 + $0x18] sm:$0xff]
    %v398 = vld [vmem:[%s6 + $0x20] sm:$0xff]
    %v399 = vld [vmem:[%s6 + $0x28] sm:$0xff]
    %v400 = vld [vmem:[%s6 + $0x30] sm:$0xff]
    %v401 = vld [vmem:[%s6 + $0x38] sm:$0xff]
    %v402 = vld [vmem:[%s6 + $0x40] sm:$0xff]
    %v403 = vld [vmem:[%s6 + $0x48] sm:$0xff]
    %v404 = vld [vmem:[%s6 + $0x50] sm:$0xff]
    %v405 = vld [vmem:[%s6 + $0x58] sm:$0xff]
    %v406 = vld [vmem:[%s6 + $0x60] sm:$0xff]
    %v407 = vld [vmem:[%s6 + $0x68] sm:$0xff]
    %v408 = vld [vmem:[%s6 + $0x70] sm:$0xff]
    %v409 = vld [vmem:[%s6 + $0x78] sm:$0xff]
    %v410 = vld [vmem:[%s6 + $0x80] sm:$0xff]
    %v411 = vld [vmem:[%s6 + $0x88] sm:$0xff]
    %v412 = vld [vmem:[%s6 + $0x90] sm:$0xff]
    %v413 = vld [vmem:[%s6 + $0x98] sm:$0xff]
    %v414 = vld [vmem:[%s6 + $0xa0] sm:$0xff]
    %v415 = vld [vmem:[%s6 + $0xa8] sm:$0xff]
    %v416 = vld [vmem:[%s6 + $0xb0] sm:$0xff]
    %v417 = vld [vmem:[%s6 + $0xb8] sm:$0xff]
    %v418 = vld [vmem:[%s6 + $0xc0] sm:$0xff]
    %v419 = vld [vmem:[%s6 + $0xc8] sm:$0xff]
    %v420 = vld [vmem:[%s6 + $0xd0] sm:$0xff]
    %v421 = vld [vmem:[%s6 + $0xd8] sm:$0xff]
    %v422 = vld [vmem:[%s6 + $0xe0] sm:$0xff]
    %v423 = vld [vmem:[%s6 + $0xe8] sm:$0xff]
    %v424 = vld [vmem:[%s6 + $0xf0] sm:$0xff]
    %v425 = vld [vmem:[%s6 + $0xf8] sm:$0xff]
    %v426 = vld [vmem:[%s6 + $0x100] sm:$0xff]
    %v427 = vld [vmem:[%s6 + $0x108] sm:$0xff]
    %v428 = vld [vmem:[%s6 + $0x110] sm:$0xff]
    %v429 = vld [vmem:[%s6 + $0x118] sm:$0xff]
    %v430 = vld [vmem:[%s6 + $0x120] sm:$0xff]
    %v431 = vld [vmem:[%s6 + $0x128] sm:$0xff]
    %v432 = vld [vmem:[%s6 + $0x130] sm:$0xff]
    %v433 = vld [vmem:[%s6 + $0x138] sm:$0xff]
    %v434 = vld [vmem:[%s6 + $0x140] sm:$0xff]
    %v435 = vld [vmem:[%s6 + $0x148] sm:$0xff]
    %v436 = vld [vmem:[%s6 + $0x150] sm:$0xff]
    %v437 = vld [vmem:[%s6 + $0x158] sm:$0xff]
    %v438 = vld [vmem:[%s6 + $0x160] sm:$0xff]
    %v439 = vld [vmem:[%s6 + $0x168] sm:$0xff]
    %v440 = vld [vmem:[%s6 + $0x170] sm:$0xff]
    %v441 = vld [vmem:[%s6 + $0x178] sm:$0xff]
    %v442 = vld [vmem:[%s6 + $0x180] sm:$0xff]
    %v443 = vld [vmem:[%s6 + $0x188] sm:$0xff]
    %v444 = vld [vmem:[%s6 + $0x190] sm:$0xff]
    %v445 = vld [vmem:[%s6 + $0x198] sm:$0xff]
    %v446 = vld [vmem:[%s6 + $0x1a0] sm:$0xff]
    %v447 = vld [vmem:[%s6 + $0x1a8] sm:$0xff]
    %v448 = vld [vmem:[%s6 + $0x1b0] sm:$0xff]
    %v449 = vld [vmem:[%s6 + $0x1b8] sm:$0xff]
    %v450 = vld [vmem:[%s6 + $0x1c0] sm:$0xff]
    %v451 = vld [vmem:[%s6 + $0x1c8] sm:$0xff]
    %v452 = vld [vmem:[%s6 + $0x1d0] sm:$0xff]
    %v453 = vld [vmem:[%s6 + $0x1d8] sm:$0xff]
    %v454 = vld [vmem:[%s6 + $0x1e0] sm:$0xff]
    %v455 = vld [vmem:[%s6 + $0x1e8] sm:$0xff]
    %v456 = vld [vmem:[%s6 + $0x1f0] sm:$0xff]
    %v457 = vld [vmem:[%s6 + $0x1f8] sm:$0xff]
    %459 = vset.pattern.permute.xlu0 0
    %460 = vperm.xlu0 %459, %v394
    %v461 = vpop.permute.xlu0 %460
    %464 = vset.pattern.permute.xlu0 0
    %465 = vperm.xlu0 %464, %v395
    %v466 = vpop.permute.xlu0 %465
    %469 = vset.pattern.permute.xlu0 0
    %470 = vperm.xlu0 %469, %v396
    %v471 = vpop.permute.xlu0 %470
    %474 = vset.pattern.permute.xlu0 0
    %475 = vperm.xlu0 %474, %v397
    %v476 = vpop.permute.xlu0 %475
    %479 = vset.pattern.permute.xlu0 0
    %480 = vperm.xlu0 %479, %v398
    %v481 = vpop.permute.xlu0 %480
    %484 = vset.pattern.permute.xlu0 0
    %485 = vperm.xlu0 %484, %v399
    %v486 = vpop.permute.xlu0 %485
    %489 = vset.pattern.permute.xlu0 0
    %490 = vperm.xlu0 %489, %v400
    %v491 = vpop.permute.xlu0 %490
    %494 = vset.pattern.permute.xlu0 0
    %495 = vperm.xlu0 %494, %v401
    %v496 = vpop.permute.xlu0 %495
    %499 = vset.pattern.permute.xlu0 0
    %500 = vperm.xlu0 %499, %v402
    %v501 = vpop.permute.xlu0 %500
    %504 = vset.pattern.permute.xlu0 0
    %505 = vperm.xlu0 %504, %v403
    %v506 = vpop.permute.xlu0 %505
    %509 = vset.pattern.permute.xlu0 0
    %510 = vperm.xlu0 %509, %v404
    %v511 = vpop.permute.xlu0 %510
    %514 = vset.pattern.permute.xlu0 0
    %515 = vperm.xlu0 %514, %v405
    %v516 = vpop.permute.xlu0 %515
    %519 = vset.pattern.permute.xlu0 0
    %520 = vperm.xlu0 %519, %v406
    %v521 = vpop.permute.xlu0 %520
    %524 = vset.pattern.permute.xlu0 0
    %525 = vperm.xlu0 %524, %v407
    %v526 = vpop.permute.xlu0 %525
    %529 = vset.pattern.permute.xlu0 0
    %530 = vperm.xlu0 %529, %v408
    %v531 = vpop.permute.xlu0 %530
    %534 = vset.pattern.permute.xlu0 0
    %535 = vperm.xlu0 %534, %v409
    %v536 = vpop.permute.xlu0 %535
    %539 = vset.pattern.permute.xlu0 0
    %540 = vperm.xlu0 %539, %v410
    %v541 = vpop.permute.xlu0 %540
    %544 = vset.pattern.permute.xlu0 0
    %545 = vperm.xlu0 %544, %v411
    %v546 = vpop.permute.xlu0 %545
    %549 = vset.pattern.permute.xlu0 0
    %550 = vperm.xlu0 %549, %v412
    %v551 = vpop.permute.xlu0 %550
    %554 = vset.pattern.permute.xlu0 0
    %555 = vperm.xlu0 %554, %v413
    %v556 = vpop.permute.xlu0 %555
    %559 = vset.pattern.permute.xlu0 0
    %560 = vperm.xlu0 %559, %v414
    %v561 = vpop.permute.xlu0 %560
    %564 = vset.pattern.permute.xlu0 0
    %565 = vperm.xlu0 %564, %v415
    %v566 = vpop.permute.xlu0 %565
    %569 = vset.pattern.permute.xlu0 0
    %570 = vperm.xlu0 %569, %v416
    %v571 = vpop.permute.xlu0 %570
    %574 = vset.pattern.permute.xlu0 0
    %575 = vperm.xlu0 %574, %v417
    %v576 = vpop.permute.xlu0 %575
    %579 = vset.pattern.permute.xlu0 0
    %580 = vperm.xlu0 %579, %v418
    %v581 = vpop.permute.xlu0 %580
    %584 = vset.pattern.permute.xlu0 0
    %585 = vperm.xlu0 %584, %v419
    %v586 = vpop.permute.xlu0 %585
    %589 = vset.pattern.permute.xlu0 0
    %590 = vperm.xlu0 %589, %v420
    %v591 = vpop.permute.xlu0 %590
    %594 = vset.pattern.permute.xlu0 0
    %595 = vperm.xlu0 %594, %v421
    %v596 = vpop.permute.xlu0 %595
    %599 = vset.pattern.permute.xlu0 0
    %600 = vperm.xlu0 %599, %v422
    %v601 = vpop.permute.xlu0 %600
    %604 = vset.pattern.permute.xlu0 0
    %605 = vperm.xlu0 %604, %v423
    %v606 = vpop.permute.xlu0 %605
    %609 = vset.pattern.permute.xlu0 0
    %610 = vperm.xlu0 %609, %v424
    %v611 = vpop.permute.xlu0 %610
    %614 = vset.pattern.permute.xlu0 0
    %615 = vperm.xlu0 %614, %v425
    %v616 = vpop.permute.xlu0 %615
    %619 = vset.pattern.permute.xlu0 0
    %620 = vperm.xlu0 %619, %v426
    %v621 = vpop.permute.xlu0 %620
    %624 = vset.pattern.permute.xlu0 0
    %625 = vperm.xlu0 %624, %v427
    %v626 = vpop.permute.xlu0 %625
    %629 = vset.pattern.permute.xlu0 0
    %630 = vperm.xlu0 %629, %v428
    %v631 = vpop.permute.xlu0 %630
    %634 = vset.pattern.permute.xlu0 0
    %635 = vperm.xlu0 %634, %v429
    %v636 = vpop.permute.xlu0 %635
    %639 = vset.pattern.permute.xlu0 0
    %640 = vperm.xlu0 %639, %v430
    %v641 = vpop.permute.xlu0 %640
    %644 = vset.pattern.permute.xlu0 0
    %645 = vperm.xlu0 %644, %v431
    %v646 = vpop.permute.xlu0 %645
    %649 = vset.pattern.permute.xlu0 0
    %650 = vperm.xlu0 %649, %v432
    %v651 = vpop.permute.xlu0 %650
    %654 = vset.pattern.permute.xlu0 0
    %655 = vperm.xlu0 %654, %v433
    %v656 = vpop.permute.xlu0 %655
    %659 = vset.pattern.permute.xlu0 0
    %660 = vperm.xlu0 %659, %v434
    %v661 = vpop.permute.xlu0 %660
    %664 = vset.pattern.permute.xlu0 0
    %665 = vperm.xlu0 %664, %v435
    %v666 = vpop.permute.xlu0 %665
    %669 = vset.pattern.permute.xlu0 0
    %670 = vperm.xlu0 %669, %v436
    %v671 = vpop.permute.xlu0 %670
    %674 = vset.pattern.permute.xlu0 0
    %675 = vperm.xlu0 %674, %v437
    %v676 = vpop.permute.xlu0 %675
    %679 = vset.pattern.permute.xlu0 0
    %680 = vperm.xlu0 %679, %v438
    %v681 = vpop.permute.xlu0 %680
    %684 = vset.pattern.permute.xlu0 0
    %685 = vperm.xlu0 %684, %v439
    %v686 = vpop.permute.xlu0 %685
    %689 = vset.pattern.permute.xlu0 0
    %690 = vperm.xlu0 %689, %v440
    %v691 = vpop.permute.xlu0 %690
    %694 = vset.pattern.permute.xlu0 0
    %695 = vperm.xlu0 %694, %v441
    %v696 = vpop.permute.xlu0 %695
    %699 = vset.pattern.permute.xlu0 0
    %700 = vperm.xlu0 %699, %v442
    %v701 = vpop.permute.xlu0 %700
    %704 = vset.pattern.permute.xlu0 0
    %705 = vperm.xlu0 %704, %v443
    %v706 = vpop.permute.xlu0 %705
    %709 = vset.pattern.permute.xlu0 0
    %710 = vperm.xlu0 %709, %v444
    %v711 = vpop.permute.xlu0 %710
    %714 = vset.pattern.permute.xlu0 0
    %715 = vperm.xlu0 %714, %v445
    %v716 = vpop.permute.xlu0 %715
    %719 = vset.pattern.permute.xlu0 0
    %720 = vperm.xlu0 %719, %v446
    %v721 = vpop.permute.xlu0 %720
    %724 = vset.pattern.permute.xlu0 0
    %725 = vperm.xlu0 %724, %v447
    %v726 = vpop.permute.xlu0 %725
    %729 = vset.pattern.permute.xlu0 0
    %730 = vperm.xlu0 %729, %v448
    %v731 = vpop.permute.xlu0 %730
    %734 = vset.pattern.permute.xlu0 0
    %735 = vperm.xlu0 %734, %v449
    %v736 = vpop.permute.xlu0 %735
    %739 = vset.pattern.permute.xlu0 0
    %740 = vperm.xlu0 %739, %v450
    %v741 = vpop.permute.xlu0 %740
    %744 = vset.pattern.permute.xlu0 0
    %745 = vperm.xlu0 %744, %v451
    %v746 = vpop.permute.xlu0 %745
    %749 = vset.pattern.permute.xlu0 0
    %750 = vperm.xlu0 %749, %v452
    %v751 = vpop.permute.xlu0 %750
    %754 = vset.pattern.permute.xlu0 0
    %755 = vperm.xlu0 %754, %v453
    %v756 = vpop.permute.xlu0 %755
    %759 = vset.pattern.permute.xlu0 0
    %760 = vperm.xlu0 %759, %v454
    %v761 = vpop.permute.xlu0 %760
    %764 = vset.pattern.permute.xlu0 0
    %765 = vperm.xlu0 %764, %v455
    %v766 = vpop.permute.xlu0 %765
    %769 = vset.pattern.permute.xlu0 0
    %770 = vperm.xlu0 %769, %v456
    %v771 = vpop.permute.xlu0 %770
    %774 = vset.pattern.permute.xlu0 0
    %775 = vperm.xlu0 %774, %v457
    %v776 = vpop.permute.xlu0 %775
    %v779 = vsel %vm248, %v330, 0
    %v782 = vsel %vm248, %v331, 0
    %v785 = vsel %vm248, %v332, 0
    %v788 = vsel %vm248, %v333, 0
    %v791 = vsel %vm248, %v334, 0
    %v794 = vsel %vm248, %v335, 0
    %v797 = vsel %vm248, %v336, 0
    %v800 = vsel %vm248, %v337, 0
    %v803 = vsel %vm248, %v338, 0
    %v806 = vsel %vm248, %v339, 0
    %v809 = vsel %vm248, %v340, 0
    %v812 = vsel %vm248, %v341, 0
    %v815 = vsel %vm248, %v342, 0
    %v818 = vsel %vm248, %v343, 0
    %v821 = vsel %vm248, %v344, 0
    %v824 = vsel %vm248, %v345, 0
    %v827 = vsel %vm248, %v346, 0
    %v830 = vsel %vm248, %v347, 0
    %v833 = vsel %vm248, %v348, 0
    %v836 = vsel %vm248, %v349, 0
    %v839 = vsel %vm248, %v350, 0
    %v842 = vsel %vm248, %v351, 0
    %v845 = vsel %vm248, %v352, 0
    %v848 = vsel %vm248, %v353, 0
    %v851 = vsel %vm248, %v354, 0
    %v854 = vsel %vm248, %v355, 0
    %v857 = vsel %vm248, %v356, 0
    %v860 = vsel %vm248, %v357, 0
    %v863 = vsel %vm248, %v358, 0
    %v866 = vsel %vm248, %v359, 0
    %v869 = vsel %vm248, %v360, 0
    %v872 = vsel %vm248, %v361, 0
    %v875 = vsel %vm248, %v362, 0
    %v878 = vsel %vm248, %v363, 0
    %v881 = vsel %vm248, %v364, 0
    %v884 = vsel %vm248, %v365, 0
    %v887 = vsel %vm248, %v366, 0
    %v890 = vsel %vm248, %v367, 0
    %v893 = vsel %vm248, %v368, 0
    %v896 = vsel %vm248, %v369, 0
    %v899 = vsel %vm248, %v370, 0
    %v902 = vsel %vm248, %v371, 0
    %v905 = vsel %vm248, %v372, 0
    %v908 = vsel %vm248, %v373, 0
    %v911 = vsel %vm248, %v374, 0
    %v914 = vsel %vm248, %v375, 0
    %v917 = vsel %vm248, %v376, 0
    %v920 = vsel %vm248, %v377, 0
    %v923 = vsel %vm248, %v378, 0
    %v926 = vsel %vm248, %v379, 0
    %v929 = vsel %vm248, %v380, 0
    %v932 = vsel %vm248, %v381, 0
    %v935 = vsel %vm248, %v382, 0
    %v938 = vsel %vm248, %v383, 0
    %v941 = vsel %vm248, %v384, 0
    %v944 = vsel %vm248, %v385, 0
    %v947 = vsel %vm248, %v386, 0
    %v950 = vsel %vm248, %v387, 0
    %v953 = vsel %vm248, %v388, 0
    %v956 = vsel %vm248, %v389, 0
    %v959 = vsel %vm248, %v390, 0
    %v962 = vsel %vm248, %v391, 0
    %v965 = vsel %vm248, %v392, 0
    %v968 = vsel %vm248, %v393, 0
    %970 = vmatpush.msra.mxu0 0.0
    %971 = vmatpush.msra.mxu0 0.0
    %972 = vmatpush.msra.mxu0 0.0
    %973 = vmatpush.msra.mxu0 0.0
    %974 = vmatpush.msra.mxu0 0.0
    %975 = vmatpush.msra.mxu0 0.0
    %976 = vmatpush.msra.mxu0 0.0
    %977 = vmatpush.msra.mxu0 0.0
    %978 = vmatpush.msra.mxu0 %v329
    %979 = vmatpush.msra.mxu0 %v328
    %980 = vmatpush.msra.mxu0 %v327
    %981 = vmatpush.msra.mxu0 %v326
    %982 = vmatpush.msra.mxu0 %v325
    %983 = vmatpush.msra.mxu0 %v324
    %984 = vmatpush.msra.mxu0 %v323
    %985 = vmatpush.msra.mxu0 %v322
    %986 = vmatmul.f32.gmra.mxu0 %v779
    %v987 = vpop.f32.mrf.mxu0
    %v988 = vadd.f32 %v461, %v987
    %989 = vmatmul.f32.gmra.mxu0 %v782
    %v990 = vpop.f32.mrf.mxu0
    %v991 = vadd.f32 %v466, %v990
    %992 = vmatmul.f32.gmra.mxu0 %v785
    %v993 = vpop.f32.mrf.mxu0
    %v994 = vadd.f32 %v471, %v993
    %995 = vmatmul.f32.gmra.mxu0 %v788
    %v996 = vpop.f32.mrf.mxu0
    %v997 = vadd.f32 %v476, %v996
    %998 = vmatmul.f32.gmra.mxu0 %v791
    %v999 = vpop.f32.mrf.mxu0
    %v1000 = vadd.f32 %v481, %v999
    %1001 = vmatmul.f32.gmra.mxu0 %v794
    %v1002 = vpop.f32.mrf.mxu0
    %v1003 = vadd.f32 %v486, %v1002
    %1004 = vmatmul.f32.gmra.mxu0 %v797
    %v1005 = vpop.f32.mrf.mxu0
    %v1006 = vadd.f32 %v491, %v1005
    %1007 = vmatmul.f32.gmra.mxu0 %v800
    %v1008 = vpop.f32.mrf.mxu0
    %v1009 = vadd.f32 %v496, %v1008
    %1010 = vmatmul.f32.gmra.mxu0 %v803
    %v1011 = vpop.f32.mrf.mxu0
    %v1012 = vadd.f32 %v501, %v1011
    %1013 = vmatmul.f32.gmra.mxu0 %v806
    %v1014 = vpop.f32.mrf.mxu0
    %v1015 = vadd.f32 %v506, %v1014
    %1016 = vmatmul.f32.gmra.mxu0 %v809
    %v1017 = vpop.f32.mrf.mxu0
    %v1018 = vadd.f32 %v511, %v1017
    %1019 = vmatmul.f32.gmra.mxu0 %v812
    %v1020 = vpop.f32.mrf.mxu0
    %v1021 = vadd.f32 %v516, %v1020
    %1022 = vmatmul.f32.gmra.mxu0 %v815
    %v1023 = vpop.f32.mrf.mxu0
    %v1024 = vadd.f32 %v521, %v1023
    %1025 = vmatmul.f32.gmra.mxu0 %v818
    %v1026 = vpop.f32.mrf.mxu0
    %v1027 = vadd.f32 %v526, %v1026
    %1028 = vmatmul.f32.gmra.mxu0 %v821
    %v1029 = vpop.f32.mrf.mxu0
    %v1030 = vadd.f32 %v531, %v1029
    %1031 = vmatmul.f32.gmra.mxu0 %v824
    %v1032 = vpop.f32.mrf.mxu0
    %v1033 = vadd.f32 %v536, %v1032
    %1034 = vmatmul.f32.gmra.mxu0 %v827
    %v1035 = vpop.f32.mrf.mxu0
    %v1036 = vadd.f32 %v541, %v1035
    %1037 = vmatmul.f32.gmra.mxu0 %v830
    %v1038 = vpop.f32.mrf.mxu0
    %v1039 = vadd.f32 %v546, %v1038
    %1040 = vmatmul.f32.gmra.mxu0 %v833
    %v1041 = vpop.f32.mrf.mxu0
    %v1042 = vadd.f32 %v551, %v1041
    %1043 = vmatmul.f32.gmra.mxu0 %v836
    %v1044 = vpop.f32.mrf.mxu0
    %v1045 = vadd.f32 %v556, %v1044
    %1046 = vmatmul.f32.gmra.mxu0 %v839
    %v1047 = vpop.f32.mrf.mxu0
    %v1048 = vadd.f32 %v561, %v1047
    %1049 = vmatmul.f32.gmra.mxu0 %v842
    %v1050 = vpop.f32.mrf.mxu0
    %v1051 = vadd.f32 %v566, %v1050
    %1052 = vmatmul.f32.gmra.mxu0 %v845
    %v1053 = vpop.f32.mrf.mxu0
    %v1054 = vadd.f32 %v571, %v1053
    %1055 = vmatmul.f32.gmra.mxu0 %v848
    %v1056 = vpop.f32.mrf.mxu0
    %v1057 = vadd.f32 %v576, %v1056
    %1058 = vmatmul.f32.gmra.mxu0 %v851
    %v1059 = vpop.f32.mrf.mxu0
    %v1060 = vadd.f32 %v581, %v1059
    %1061 = vmatmul.f32.gmra.mxu0 %v854
    %v1062 = vpop.f32.mrf.mxu0
    %v1063 = vadd.f32 %v586, %v1062
    %1064 = vmatmul.f32.gmra.mxu0 %v857
    %v1065 = vpop.f32.mrf.mxu0
    %v1066 = vadd.f32 %v591, %v1065
    %1067 = vmatmul.f32.gmra.mxu0 %v860
    %v1068 = vpop.f32.mrf.mxu0
    %v1069 = vadd.f32 %v596, %v1068
    %1070 = vmatmul.f32.gmra.mxu0 %v863
    %v1071 = vpop.f32.mrf.mxu0
    %v1072 = vadd.f32 %v601, %v1071
    %1073 = vmatmul.f32.gmra.mxu0 %v866
    %v1074 = vpop.f32.mrf.mxu0
    %v1075 = vadd.f32 %v606, %v1074
    %1076 = vmatmul.f32.gmra.mxu0 %v869
    %v1077 = vpop.f32.mrf.mxu0
    %v1078 = vadd.f32 %v611, %v1077
    %1079 = vmatmul.f32.gmra.mxu0 %v872
    %v1080 = vpop.f32.mrf.mxu0
    %v1081 = vadd.f32 %v616, %v1080
    %1082 = vmatmul.f32.gmra.mxu0 %v875
    %v1083 = vpop.f32.mrf.mxu0
    %v1084 = vadd.f32 %v621, %v1083
    %1085 = vmatmul.f32.gmra.mxu0 %v878
    %v1086 = vpop.f32.mrf.mxu0
    %v1087 = vadd.f32 %v626, %v1086
    %1088 = vmatmul.f32.gmra.mxu0 %v881
    %v1089 = vpop.f32.mrf.mxu0
    %v1090 = vadd.f32 %v631, %v1089
    %1091 = vmatmul.f32.gmra.mxu0 %v884
    %v1092 = vpop.f32.mrf.mxu0
    %v1093 = vadd.f32 %v636, %v1092
    %1094 = vmatmul.f32.gmra.mxu0 %v887
    %v1095 = vpop.f32.mrf.mxu0
    %v1096 = vadd.f32 %v641, %v1095
    %1097 = vmatmul.f32.gmra.mxu0 %v890
    %v1098 = vpop.f32.mrf.mxu0
    %v1099 = vadd.f32 %v646, %v1098
    %1100 = vmatmul.f32.gmra.mxu0 %v893
    %v1101 = vpop.f32.mrf.mxu0
    %v1102 = vadd.f32 %v651, %v1101
    %1103 = vmatmul.f32.gmra.mxu0 %v896
    %v1104 = vpop.f32.mrf.mxu0
    %v1105 = vadd.f32 %v656, %v1104
    %1106 = vmatmul.f32.gmra.mxu0 %v899
    %v1107 = vpop.f32.mrf.mxu0
    %v1108 = vadd.f32 %v661, %v1107
    %1109 = vmatmul.f32.gmra.mxu0 %v902
    %v1110 = vpop.f32.mrf.mxu0
    %v1111 = vadd.f32 %v666, %v1110
    %1112 = vmatmul.f32.gmra.mxu0 %v905
    %v1113 = vpop.f32.mrf.mxu0
    %v1114 = vadd.f32 %v671, %v1113
    %1115 = vmatmul.f32.gmra.mxu0 %v908
    %v1116 = vpop.f32.mrf.mxu0
    %v1117 = vadd.f32 %v676, %v1116
    %1118 = vmatmul.f32.gmra.mxu0 %v911
    %v1119 = vpop.f32.mrf.mxu0
    %v1120 = vadd.f32 %v681, %v1119
    %1121 = vmatmul.f32.gmra.mxu0 %v914
    %v1122 = vpop.f32.mrf.mxu0
    %v1123 = vadd.f32 %v686, %v1122
    %1124 = vmatmul.f32.gmra.mxu0 %v917
    %v1125 = vpop.f32.mrf.mxu0
    %v1126 = vadd.f32 %v691, %v1125
    %1127 = vmatmul.f32.gmra.mxu0 %v920
    %v1128 = vpop.f32.mrf.mxu0
    %v1129 = vadd.f32 %v696, %v1128
    %1130 = vmatmul.f32.gmra.mxu0 %v923
    %v1131 = vpop.f32.mrf.mxu0
    %v1132 = vadd.f32 %v701, %v1131
    %1133 = vmatmul.f32.gmra.mxu0 %v926
    %v1134 = vpop.f32.mrf.mxu0
    %v1135 = vadd.f32 %v706, %v1134
    %1136 = vmatmul.f32.gmra.mxu0 %v929
    %v1137 = vpop.f32.mrf.mxu0
    %v1138 = vadd.f32 %v711, %v1137
    %1139 = vmatmul.f32.gmra.mxu0 %v932
    %v1140 = vpop.f32.mrf.mxu0
    %v1141 = vadd.f32 %v716, %v1140
    %1142 = vmatmul.f32.gmra.mxu0 %v935
    %v1143 = vpop.f32.mrf.mxu0
    %v1144 = vadd.f32 %v721, %v1143
    %1145 = vmatmul.f32.gmra.mxu0 %v938
    %v1146 = vpop.f32.mrf.mxu0
    %v1147 = vadd.f32 %v726, %v1146
    %1148 = vmatmul.f32.gmra.mxu0 %v941
    %v1149 = vpop.f32.mrf.mxu0
    %v1150 = vadd.f32 %v731, %v1149
    %1151 = vmatmul.f32.gmra.mxu0 %v944
    %v1152 = vpop.f32.mrf.mxu0
    %v1153 = vadd.f32 %v736, %v1152
    %1154 = vmatmul.f32.gmra.mxu0 %v947
    %v1155 = vpop.f32.mrf.mxu0
    %v1156 = vadd.f32 %v741, %v1155
    %1157 = vmatmul.f32.gmra.mxu0 %v950
    %v1158 = vpop.f32.mrf.mxu0
    %v1159 = vadd.f32 %v746, %v1158
    %1160 = vmatmul.f32.gmra.mxu0 %v953
    %v1161 = vpop.f32.mrf.mxu0
    %v1162 = vadd.f32 %v751, %v1161
    %1163 = vmatmul.f32.gmra.mxu0 %v956
    %v1164 = vpop.f32.mrf.mxu0
    %v1165 = vadd.f32 %v756, %v1164
    %1166 = vmatmul.f32.gmra.mxu0 %v959
    %v1167 = vpop.f32.mrf.mxu0
    %v1168 = vadd.f32 %v761, %v1167
    %1169 = vmatmul.f32.gmra.mxu0 %v962
    %v1170 = vpop.f32.mrf.mxu0
    %v1171 = vadd.f32 %v766, %v1170
    %1172 = vmatmul.f32.gmra.mxu0 %v965
    %v1173 = vpop.f32.mrf.mxu0
    %v1174 = vadd.f32 %v771, %v1173
    %1175 = vmatmul.f32.gmra.mxu0 %v968
    %v1176 = vpop.f32.mrf.mxu0
    %v1177 = vadd.f32 %v776, %v1176
    %1178 = vdwg.mxu0
    %vm1179 = vcmask 64512
    %1180 = vst.msk [vmem:[#allocation2] sm:$0xff] %vm1179, %v988
    %1181 = vst.msk [vmem:[#allocation2 + $0x8] sm:$0xff] %vm1179, %v991
    %1182 = vst.msk [vmem:[#allocation2 + $0x10] sm:$0xff] %vm1179, %v994
    %1183 = vst.msk [vmem:[#allocation2 + $0x18] sm:$0xff] %vm1179, %v997
    %1188 = vrot.lane.b32.xlu0 %v1000, 8
    %v1189 = vpop.permute.xlu0 %1188
    %1190 = vrot.lane.b32.xlu0 %v1003, 8
    %v1191 = vpop.permute.xlu0 %1190
    %1192 = vrot.lane.b32.xlu0 %v1006, 8
    %v1193 = vpop.permute.xlu0 %1192
    %1194 = vrot.lane.b32.xlu0 %v1009, 8
    %v1195 = vpop.permute.xlu0 %1194
    %vm1200 = vcmask 130112
    %1201 = vst.msk [vmem:[#allocation2] sm:$0xff] %vm1200, %v1189
    %1202 = vst.msk [vmem:[#allocation2 + $0x8] sm:$0xff] %vm1200, %v1191
    %1203 = vst.msk [vmem:[#allocation2 + $0x10] sm:$0xff] %vm1200, %v1193
    %1204 = vst.msk [vmem:[#allocation2 + $0x18] sm:$0xff] %vm1200, %v1195
    %1209 = vrot.lane.b32.xlu0 %v1012, 16
    %v1210 = vpop.permute.xlu0 %1209
    %1211 = vrot.lane.b32.xlu0 %v1015, 16
    %v1212 = vpop.permute.xlu0 %1211
    %1213 = vrot.lane.b32.xlu0 %v1018, 16
    %v1214 = vpop.permute.xlu0 %1213
    %1215 = vrot.lane.b32.xlu0 %v1021, 16
    %v1216 = vpop.permute.xlu0 %1215
    %vm1221 = vcmask 195712
    %1222 = vst.msk [vmem:[#allocation2] sm:$0xff] %vm1221, %v1210
    %1223 = vst.msk [vmem:[#allocation2 + $0x8] sm:$0xff] %vm1221, %v1212
    %1224 = vst.msk [vmem:[#allocation2 + $0x10] sm:$0xff] %vm1221, %v1214
    %1225 = vst.msk [vmem:[#allocation2 + $0x18] sm:$0xff] %vm1221, %v1216
    %1230 = vrot.lane.b32.xlu0 %v1024, 24
    %v1231 = vpop.permute.xlu0 %1230
    %1232 = vrot.lane.b32.xlu0 %v1027, 24
    %v1233 = vpop.permute.xlu0 %1232
    %1234 = vrot.lane.b32.xlu0 %v1030, 24
    %v1235 = vpop.permute.xlu0 %1234
    %1236 = vrot.lane.b32.xlu0 %v1033, 24
    %v1237 = vpop.permute.xlu0 %1236
    %vm1242 = vcmask 261312
    %1243 = vst.msk [vmem:[#allocation2] sm:$0xff] %vm1242, %v1231
    %1244 = vst.msk [vmem:[#allocation2 + $0x8] sm:$0xff] %vm1242, %v1233
    %1245 = vst.msk [vmem:[#allocation2 + $0x10] sm:$0xff] %vm1242, %v1235
    %1246 = vst.msk [vmem:[#allocation2 + $0x18] sm:$0xff] %vm1242, %v1237
    %1251 = vrot.lane.b32.xlu0 %v1036, 32
    %v1252 = vpop.permute.xlu0 %1251
    %1253 = vrot.lane.b32.xlu0 %v1039, 32
    %v1254 = vpop.permute.xlu0 %1253
    %1255 = vrot.lane.b32.xlu0 %v1042, 32
    %v1256 = vpop.permute.xlu0 %1255
    %1257 = vrot.lane.b32.xlu0 %v1045, 32
    %v1258 = vpop.permute.xlu0 %1257
    %vm1263 = vcmask 326912
    %1264 = vst.msk [vmem:[#allocation2] sm:$0xff] %vm1263, %v1252
    %1265 = vst.msk [vmem:[#allocation2 + $0x8] sm:$0xff] %vm1263, %v1254
    %1266 = vst.msk [vmem:[#allocation2 + $0x10] sm:$0xff] %vm1263, %v1256
    %1267 = vst.msk [vmem:[#allocation2 + $0x18] sm:$0xff] %vm1263, %v1258
    %1272 = vrot.lane.b32.xlu0 %v1048, 40
    %v1273 = vpop.permute.xlu0 %1272
    %1274 = vrot.lane.b32.xlu0 %v1051, 40
    %v1275 = vpop.permute.xlu0 %1274
    %1276 = vrot.lane.b32.xlu0 %v1054, 40
    %v1277 = vpop.permute.xlu0 %1276
    %1278 = vrot.lane.b32.xlu0 %v1057, 40
    %v1279 = vpop.permute.xlu0 %1278
    %vm1284 = vcmask 392512
    %1285 = vst.msk [vmem:[#allocation2] sm:$0xff] %vm1284, %v1273
    %1286 = vst.msk [vmem:[#allocation2 + $0x8] sm:$0xff] %vm1284, %v1275
    %1287 = vst.msk [vmem:[#allocation2 + $0x10] sm:$0xff] %vm1284, %v1277
    %1288 = vst.msk [vmem:[#allocation2 + $0x18] sm:$0xff] %vm1284, %v1279
    %1293 = vrot.lane.b32.xlu0 %v1060, 48
    %v1294 = vpop.permute.xlu0 %1293
    %1295 = vrot.lane.b32.xlu0 %v1063, 48
    %v1296 = vpop.permute.xlu0 %1295
    %1297 = vrot.lane.b32.xlu0 %v1066, 48
    %v1298 = vpop.permute.xlu0 %1297
    %1299 = vrot.lane.b32.xlu0 %v1069, 48
    %v1300 = vpop.permute.xlu0 %1299
    %vm1305 = vcmask 458112
    %1306 = vst.msk [vmem:[#allocation2] sm:$0xff] %vm1305, %v1294
    %1307 = vst.msk [vmem:[#allocation2 + $0x8] sm:$0xff] %vm1305, %v1296
    %1308 = vst.msk [vmem:[#allocation2 + $0x10] sm:$0xff] %vm1305, %v1298
    %1309 = vst.msk [vmem:[#allocation2 + $0x18] sm:$0xff] %vm1305, %v1300
    %1314 = vrot.lane.b32.xlu0 %v1072, 56
    %v1315 = vpop.permute.xlu0 %1314
    %1316 = vrot.lane.b32.xlu0 %v1075, 56
    %v1317 = vpop.permute.xlu0 %1316
    %1318 = vrot.lane.b32.xlu0 %v1078, 56
    %v1319 = vpop.permute.xlu0 %1318
    %1320 = vrot.lane.b32.xlu0 %v1081, 56
    %v1321 = vpop.permute.xlu0 %1320
    %vm1326 = vcmask 523712
    %1327 = vst.msk [vmem:[#allocation2] sm:$0xff] %vm1326, %v1315
    %1328 = vst.msk [vmem:[#allocation2 + $0x8] sm:$0xff] %vm1326, %v1317
    %1329 = vst.msk [vmem:[#allocation2 + $0x10] sm:$0xff] %vm1326, %v1319
    %1330 = vst.msk [vmem:[#allocation2 + $0x18] sm:$0xff] %vm1326, %v1321
    %1335 = vrot.lane.b32.xlu0 %v1084, 64
    %v1336 = vpop.permute.xlu0 %1335
    %1337 = vrot.lane.b32.xlu0 %v1087, 64
    %v1338 = vpop.permute.xlu0 %1337
    %1339 = vrot.lane.b32.xlu0 %v1090, 64
    %v1340 = vpop.permute.xlu0 %1339
    %1341 = vrot.lane.b32.xlu0 %v1093, 64
    %v1342 = vpop.permute.xlu0 %1341
    %vm1347 = vcmask 589312
    %1348 = vst.msk [vmem:[#allocation2] sm:$0xff] %vm1347, %v1336
    %1349 = vst.msk [vmem:[#allocation2 + $0x8] sm:$0xff] %vm1347, %v1338
    %1350 = vst.msk [vmem:[#allocation2 + $0x10] sm:$0xff] %vm1347, %v1340
    %1351 = vst.msk [vmem:[#allocation2 + $0x18] sm:$0xff] %vm1347, %v1342
    %1356 = vrot.lane.b32.xlu0 %v1096, 72
    %v1357 = vpop.permute.xlu0 %1356
    %1358 = vrot.lane.b32.xlu0 %v1099, 72
    %v1359 = vpop.permute.xlu0 %1358
    %1360 = vrot.lane.b32.xlu0 %v1102, 72
    %v1361 = vpop.permute.xlu0 %1360
    %1362 = vrot.lane.b32.xlu0 %v1105, 72
    %v1363 = vpop.permute.xlu0 %1362
    %vm1368 = vcmask 654912
    %1369 = vst.msk [vmem:[#allocation2] sm:$0xff] %vm1368, %v1357
    %1370 = vst.msk [vmem:[#allocation2 + $0x8] sm:$0xff] %vm1368, %v1359
    %1371 = vst.msk [vmem:[#allocation2 + $0x10] sm:$0xff] %vm1368, %v1361
    %1372 = vst.msk [vmem:[#allocation2 + $0x18] sm:$0xff] %vm1368, %v1363
    %1377 = vrot.lane.b32.xlu0 %v1108, 80
    %v1378 = vpop.permute.xlu0 %1377
    %1379 = vrot.lane.b32.xlu0 %v1111, 80
    %v1380 = vpop.permute.xlu0 %1379
    %1381 = vrot.lane.b32.xlu0 %v1114, 80
    %v1382 = vpop.permute.xlu0 %1381
    %1383 = vrot.lane.b32.xlu0 %v1117, 80
    %v1384 = vpop.permute.xlu0 %1383
    %vm1389 = vcmask 720512
    %1390 = vst.msk [vmem:[#allocation2] sm:$0xff] %vm1389, %v1378
    %1391 = vst.msk [vmem:[#allocation2 + $0x8] sm:$0xff] %vm1389, %v1380
    %1392 = vst.msk [vmem:[#allocation2 + $0x10] sm:$0xff] %vm1389, %v1382
    %1393 = vst.msk [vmem:[#allocation2 + $0x18] sm:$0xff] %vm1389, %v1384
    %1398 = vrot.lane.b32.xlu0 %v1120, 88
    %v1399 = vpop.permute.xlu0 %1398
    %1400 = vrot.lane.b32.xlu0 %v1123, 88
    %v1401 = vpop.permute.xlu0 %1400
    %1402 = vrot.lane.b32.xlu0 %v1126, 88
    %v1403 = vpop.permute.xlu0 %1402
    %1404 = vrot.lane.b32.xlu0 %v1129, 88
    %v1405 = vpop.permute.xlu0 %1404
    %vm1410 = vcmask 786112
    %1411 = vst.msk [vmem:[#allocation2] sm:$0xff] %vm1410, %v1399
    %1412 = vst.msk [vmem:[#allocation2 + $0x8] sm:$0xff] %vm1410, %v1401
    %1413 = vst.msk [vmem:[#allocation2 + $0x10] sm:$0xff] %vm1410, %v1403
    %1414 = vst.msk [vmem:[#allocation2 + $0x18] sm:$0xff] %vm1410, %v1405
    %1419 = vrot.lane.b32.xlu0 %v1132, 96
    %v1420 = vpop.permute.xlu0 %1419
    %1421 = vrot.lane.b32.xlu0 %v1135, 96
    %v1422 = vpop.permute.xlu0 %1421
    %1423 = vrot.lane.b32.xlu0 %v1138, 96
    %v1424 = vpop.permute.xlu0 %1423
    %1425 = vrot.lane.b32.xlu0 %v1141, 96
    %v1426 = vpop.permute.xlu0 %1425
    %vm1431 = vcmask 851712
    %1432 = vst.msk [vmem:[#allocation2] sm:$0xff] %vm1431, %v1420
    %1433 = vst.msk [vmem:[#allocation2 + $0x8] sm:$0xff] %vm1431, %v1422
    %1434 = vst.msk [vmem:[#allocation2 + $0x10] sm:$0xff] %vm1431, %v1424
    %1435 = vst.msk [vmem:[#allocation2 + $0x18] sm:$0xff] %vm1431, %v1426
    %1440 = vrot.lane.b32.xlu0 %v1144, 104
    %v1441 = vpop.permute.xlu0 %1440
    %1442 = vrot.lane.b32.xlu0 %v1147, 104
    %v1443 = vpop.permute.xlu0 %1442
    %1444 = vrot.lane.b32.xlu0 %v1150, 104
    %v1445 = vpop.permute.xlu0 %1444
    %1446 = vrot.lane.b32.xlu0 %v1153, 104
    %v1447 = vpop.permute.xlu0 %1446
    %vm1452 = vcmask 917312
    %1453 = vst.msk [vmem:[#allocation2] sm:$0xff] %vm1452, %v1441
    %1454 = vst.msk [vmem:[#allocation2 + $0x8] sm:$0xff] %vm1452, %v1443
    %1455 = vst.msk [vmem:[#allocation2 + $0x10] sm:$0xff] %vm1452, %v1445
    %1456 = vst.msk [vmem:[#allocation2 + $0x18] sm:$0xff] %vm1452, %v1447
    %1461 = vrot.lane.b32.xlu0 %v1156, 112
    %v1462 = vpop.permute.xlu0 %1461
    %1463 = vrot.lane.b32.xlu0 %v1159, 112
    %v1464 = vpop.permute.xlu0 %1463
    %1465 = vrot.lane.b32.xlu0 %v1162, 112
    %v1466 = vpop.permute.xlu0 %1465
    %1467 = vrot.lane.b32.xlu0 %v1165, 112
    %v1468 = vpop.permute.xlu0 %1467
    %vm1473 = vcmask 982912
    %1474 = vst.msk [vmem:[#allocation2] sm:$0xff] %vm1473, %v1462
    %1475 = vst.msk [vmem:[#allocation2 + $0x8] sm:$0xff] %vm1473, %v1464
    %1476 = vst.msk [vmem:[#allocation2 + $0x10] sm:$0xff] %vm1473, %v1466
    %1477 = vst.msk [vmem:[#allocation2 + $0x18] sm:$0xff] %vm1473, %v1468
    %1482 = vrot.lane.b32.xlu0 %v1168, 120
    %v1483 = vpop.permute.xlu0 %1482
    %1484 = vrot.lane.b32.xlu0 %v1171, 120
    %v1485 = vpop.permute.xlu0 %1484
    %1486 = vrot.lane.b32.xlu0 %v1174, 120
    %v1487 = vpop.permute.xlu0 %1486
    %1488 = vrot.lane.b32.xlu0 %v1177, 120
    %v1489 = vpop.permute.xlu0 %1488
    %vm1494 = vcmask 1048512
    %1495 = vst.msk [vmem:[#allocation2] sm:$0xff] %vm1494, %v1483
    %1496 = vst.msk [vmem:[#allocation2 + $0x8] sm:$0xff] %vm1494, %v1485
    %1497 = vst.msk [vmem:[#allocation2 + $0x10] sm:$0xff] %vm1494, %v1487
    %1498 = vst.msk [vmem:[#allocation2 + $0x18] sm:$0xff] %vm1494, %v1489
    %v1499 = vld [vmem:[%s7] sm:$0xff]
    %v1500 = vld [vmem:[%s7 + $0x8] sm:$0xff]
    %v1501 = vld [vmem:[%s7 + $0x10] sm:$0xff]
    %v1502 = vld [vmem:[%s7 + $0x18] sm:$0xff]
    %v1503 = vld [vmem:[%s7 + $0x20] sm:$0xff]
    %v1504 = vld [vmem:[%s7 + $0x28] sm:$0xff]
    %v1505 = vld [vmem:[%s7 + $0x30] sm:$0xff]
    %v1506 = vld [vmem:[%s7 + $0x38] sm:$0xff]
    %v1507 = vld [vmem:[#allocation2] sm:$0xff]
    %v1508 = vld [vmem:[#allocation2 + $0x8] sm:$0xff]
    %v1509 = vld [vmem:[#allocation2 + $0x10] sm:$0xff]
    %v1510 = vld [vmem:[#allocation2 + $0x18] sm:$0xff]
    %v1511 = vld [vmem:[%s8] sm:$0xff]
    %v1512 = vld [vmem:[%s8 + $0x8] sm:$0xff]
    %v1513 = vld [vmem:[%s8 + $0x10] sm:$0xff]
    %v1514 = vld [vmem:[%s8 + $0x18] sm:$0xff]
    %v1515 = vld [vmem:[%s8 + $0x20] sm:$0xff]
    %v1516 = vld [vmem:[%s8 + $0x28] sm:$0xff]
    %v1517 = vld [vmem:[%s8 + $0x30] sm:$0xff]
    %v1518 = vld [vmem:[%s8 + $0x38] sm:$0xff]
    %1520 = vset.pattern.permute.xlu0 0
    %1521 = vperm.xlu0 %1520, %v1511
    %v1522 = vpop.permute.xlu0 %1521
    %1525 = vset.pattern.permute.xlu0 0
    %1526 = vperm.xlu0 %1525, %v1512
    %v1527 = vpop.permute.xlu0 %1526
    %1530 = vset.pattern.permute.xlu0 0
    %1531 = vperm.xlu0 %1530, %v1513
    %v1532 = vpop.permute.xlu0 %1531
    %1535 = vset.pattern.permute.xlu0 0
    %1536 = vperm.xlu0 %1535, %v1514
    %v1537 = vpop.permute.xlu0 %1536
    %1540 = vset.pattern.permute.xlu0 0
    %1541 = vperm.xlu0 %1540, %v1515
    %v1542 = vpop.permute.xlu0 %1541
    %1545 = vset.pattern.permute.xlu0 0
    %1546 = vperm.xlu0 %1545, %v1516
    %v1547 = vpop.permute.xlu0 %1546
    %1550 = vset.pattern.permute.xlu0 0
    %1551 = vperm.xlu0 %1550, %v1517
    %v1552 = vpop.permute.xlu0 %1551
    %1555 = vset.pattern.permute.xlu0 0
    %1556 = vperm.xlu0 %1555, %v1518
    %v1557 = vpop.permute.xlu0 %1556
    %vm1559 = vcmask 261120
    %v1561 = vsel %vm1559, %v1499, 0
    %v1564 = vsel %vm1559, %v1500, 0
    %v1567 = vsel %vm1559, %v1501, 0
    %v1570 = vsel %vm1559, %v1502, 0
    %v1573 = vsel %vm1559, %v1503, 0
    %v1576 = vsel %vm1559, %v1504, 0
    %v1579 = vsel %vm1559, %v1505, 0
    %v1582 = vsel %vm1559, %v1506, 0
    %1584 = vmatpush.msra.mxu0 0.0
    %1585 = vmatpush.msra.mxu0 0.0
    %1586 = vmatpush.msra.mxu0 0.0
    %1587 = vmatpush.msra.mxu0 0.0
    %1588 = vmatpush.msra.mxu0 0.0
    %1589 = vmatpush.msra.mxu0 0.0
    %1590 = vmatpush.msra.mxu0 0.0
    %1591 = vmatpush.msra.mxu0 0.0
    %1592 = vmatpush.msra.mxu0 0.0
    %1593 = vmatpush.msra.mxu0 0.0
    %1594 = vmatpush.msra.mxu0 0.0
    %1595 = vmatpush.msra.mxu0 0.0
    %1596 = vmatpush.msra.mxu0 %v1510
    %1597 = vmatpush.msra.mxu0 %v1509
    %1598 = vmatpush.msra.mxu0 %v1508
    %1599 = vmatpush.msra.mxu0 %v1507
    %1600 = vmatmul.f32.gmra.mxu0 %v1561
    %v1601 = vpop.f32.mrf.mxu0
    %v1602 = vadd.f32 %v1522, %v1601
    %1603 = vmatmul.f32.gmra.mxu0 %v1564
    %v1604 = vpop.f32.mrf.mxu0
    %v1605 = vadd.f32 %v1527, %v1604
    %1606 = vmatmul.f32.gmra.mxu0 %v1567
    %v1607 = vpop.f32.mrf.mxu0
    %v1608 = vadd.f32 %v1532, %v1607
    %1609 = vmatmul.f32.gmra.mxu0 %v1570
    %v1610 = vpop.f32.mrf.mxu0
    %v1611 = vadd.f32 %v1537, %v1610
    %1612 = vmatmul.f32.gmra.mxu0 %v1573
    %v1613 = vpop.f32.mrf.mxu0
    %v1614 = vadd.f32 %v1542, %v1613
    %1615 = vmatmul.f32.gmra.mxu0 %v1576
    %v1616 = vpop.f32.mrf.mxu0
    %v1617 = vadd.f32 %v1547, %v1616
    %1618 = vmatmul.f32.gmra.mxu0 %v1579
    %v1619 = vpop.f32.mrf.mxu0
    %v1620 = vadd.f32 %v1552, %v1619
    %1621 = vmatmul.f32.gmra.mxu0 %v1582
    %v1622 = vpop.f32.mrf.mxu0
    %v1623 = vadd.f32 %v1557, %v1622
    %1624 = vdwg.mxu0
    %v1625 = vmax.f32 %v1602, 0.0
    %v1626 = vmax.f32 %v1605, 0.0
    %v1627 = vmax.f32 %v1608, 0.0
    %v1628 = vmax.f32 %v1611, 0.0
    %v1629 = vmax.f32 %v1614, 0.0
    %v1630 = vmax.f32 %v1617, 0.0
    %v1631 = vmax.f32 %v1620, 0.0
    %v1632 = vmax.f32 %v1623, 0.0
    %1633 = vst [vmem:[#allocation3] sm:$0xff] %v1625
    %1634 = vst [vmem:[#allocation3 + $0x20] sm:$0xff] %v1626
    %1635 = vst [vmem:[#allocation3 + $0x8] sm:$0xff] %v1627
    %1636 = vst [vmem:[#allocation3 + $0x28] sm:$0xff] %v1628
    %1637 = vst [vmem:[#allocation3 + $0x10] sm:$0xff] %v1629
    %1638 = vst [vmem:[#allocation3 + $0x30] sm:$0xff] %v1630
    %1639 = vst [vmem:[#allocation3 + $0x18] sm:$0xff] %v1631
    %1640 = vst [vmem:[#allocation3 + $0x38] sm:$0xff] %v1632
    %v1641 = vld [vmem:[%s9] sm:$0xff]
    %v1642 = vld [vmem:[%s9 + $0x8] sm:$0xff]
    %v1643 = vld [vmem:[%s9 + $0x10] sm:$0xff]
    %v1644 = vld [vmem:[%s9 + $0x18] sm:$0xff]
    %v1645 = vld [vmem:[#allocation3] sm:$0xff]
    %v1646 = vld [vmem:[#allocation3 + $0x8] sm:$0xff]
    %v1647 = vld [vmem:[#allocation3 + $0x10] sm:$0xff]
    %v1648 = vld [vmem:[#allocation3 + $0x18] sm:$0xff]
    %v1649 = vld [vmem:[#allocation3 + $0x20] sm:$0xff]
    %v1650 = vld [vmem:[#allocation3 + $0x28] sm:$0xff]
    %v1651 = vld [vmem:[#allocation3 + $0x30] sm:$0xff]
    %v1652 = vld [vmem:[#allocation3 + $0x38] sm:$0xff]
    %v1653 = vld [vmem:[%s10] sm:$0xff]
    %v1654 = vld [vmem:[%s10 + $0x8] sm:$0xff]
    %v1655 = vld [vmem:[%s10 + $0x10] sm:$0xff]
    %v1656 = vld [vmem:[%s10 + $0x18] sm:$0xff]
    %1658 = vset.pattern.permute.xlu0 0
    %1659 = vperm.xlu0 %1658, %v1653
    %v1660 = vpop.permute.xlu0 %1659
    %1663 = vset.pattern.permute.xlu0 0
    %1664 = vperm.xlu0 %1663, %v1654
    %v1665 = vpop.permute.xlu0 %1664
    %1668 = vset.pattern.permute.xlu0 0
    %1669 = vperm.xlu0 %1668, %v1655
    %v1670 = vpop.permute.xlu0 %1669
    %1673 = vset.pattern.permute.xlu0 0
    %1674 = vperm.xlu0 %1673, %v1656
    %v1675 = vpop.permute.xlu0 %1674
    %v1678 = vsel %vm118, %v1641, 0
    %v1681 = vsel %vm118, %v1642, 0
    %v1684 = vsel %vm118, %v1643, 0
    %v1687 = vsel %vm118, %v1644, 0
    %1689 = vmatpush.msra.mxu0 0.0
    %1690 = vmatpush.msra.mxu0 0.0
    %1691 = vmatpush.msra.mxu0 0.0
    %1692 = vmatpush.msra.mxu0 0.0
    %1693 = vmatpush.msra.mxu0 0.0
    %1694 = vmatpush.msra.mxu0 0.0
    %1695 = vmatpush.msra.mxu0 0.0
    %1696 = vmatpush.msra.mxu0 0.0
    %1697 = vmatpush.msra.mxu0 0.0
    %1698 = vmatpush.msra.mxu0 0.0
    %1699 = vmatpush.msra.mxu0 0.0
    %1700 = vmatpush.msra.mxu0 0.0
    %1701 = vmatpush.msra.mxu0 0.0
    %1702 = vmatpush.msra.mxu0 0.0
    %1703 = vmatpush.msra.mxu0 %v1649
    %1704 = vmatpush.msra.mxu0 %v1645
    %1705 = vmatmul.f32.gmra.mxu0 %v1678
    %v1706 = vpop.f32.mrf.mxu0
    %v1707 = vadd.f32 %v1660, %v1706
    %1708 = vmatmul.f32.gmra.mxu0 %v1681
    %v1709 = vpop.f32.mrf.mxu0
    %v1710 = vadd.f32 %v1665, %v1709
    %1711 = vmatmul.f32.gmra.mxu0 %v1684
    %v1712 = vpop.f32.mrf.mxu0
    %v1713 = vadd.f32 %v1670, %v1712
    %1714 = vmatmul.f32.gmra.mxu0 %v1687
    %v1715 = vpop.f32.mrf.mxu0
    %v1716 = vadd.f32 %v1675, %v1715
    %1717 = vdwg.mxu0
    %1718 = vmatpush.msra.mxu0 0.0
    %1719 = vmatpush.msra.mxu0 0.0
    %1720 = vmatpush.msra.mxu0 0.0
    %1721 = vmatpush.msra.mxu0 0.0
    %1722 = vmatpush.msra.mxu0 0.0
    %1723 = vmatpush.msra.mxu0 0.0
    %1724 = vmatpush.msra.mxu0 0.0
    %1725 = vmatpush.msra.mxu0 0.0
    %1726 = vmatpush.msra.mxu0 0.0
    %1727 = vmatpush.msra.mxu0 0.0
    %1728 = vmatpush.msra.mxu0 0.0
    %1729 = vmatpush.msra.mxu0 0.0
    %1730 = vmatpush.msra.mxu0 0.0
    %1731 = vmatpush.msra.mxu0 0.0
    %1732 = vmatpush.msra.mxu0 %v1650
    %1733 = vmatpush.msra.mxu0 %v1646
    %1734 = vmatmul.f32.gmra.mxu0 %v1678
    %v1735 = vpop.f32.mrf.mxu0
    %v1736 = vadd.f32 %v1660, %v1735
    %1737 = vmatmul.f32.gmra.mxu0 %v1681
    %v1738 = vpop.f32.mrf.mxu0
    %v1739 = vadd.f32 %v1665, %v1738
    %1740 = vmatmul.f32.gmra.mxu0 %v1684
    %v1741 = vpop.f32.mrf.mxu0
    %v1742 = vadd.f32 %v1670, %v1741
    %1743 = vmatmul.f32.gmra.mxu0 %v1687
    %v1744 = vpop.f32.mrf.mxu0
    %v1745 = vadd.f32 %v1675, %v1744
    %1746 = vdwg.mxu0
    %1747 = vmatpush.msra.mxu0 0.0
    %1748 = vmatpush.msra.mxu0 0.0
    %1749 = vmatpush.msra.mxu0 0.0
    %1750 = vmatpush.msra.mxu0 0.0
    %1751 = vmatpush.msra.mxu0 0.0
    %1752 = vmatpush.msra.mxu0 0.0
    %1753 = vmatpush.msra.mxu0 0.0
    %1754 = vmatpush.msra.mxu0 0.0
    %1755 = vmatpush.msra.mxu0 0.0
    %1756 = vmatpush.msra.mxu0 0.0
    %1757 = vmatpush.msra.mxu0 0.0
    %1758 = vmatpush.msra.mxu0 0.0
    %1759 = vmatpush.msra.mxu0 0.0
    %1760 = vmatpush.msra.mxu0 0.0
    %1761 = vmatpush.msra.mxu0 %v1651
    %1762 = vmatpush.msra.mxu0 %v1647
    %1763 = vmatmul.f32.gmra.mxu0 %v1678
    %v1764 = vpop.f32.mrf.mxu0
    %v1765 = vadd.f32 %v1660, %v1764
    %1766 = vmatmul.f32.gmra.mxu0 %v1681
    %v1767 = vpop.f32.mrf.mxu0
    %v1768 = vadd.f32 %v1665, %v1767
    %1769 = vmatmul.f32.gmra.mxu0 %v1684
    %v1770 = vpop.f32.mrf.mxu0
    %v1771 = vadd.f32 %v1670, %v1770
    %1772 = vmatmul.f32.gmra.mxu0 %v1687
    %v1773 = vpop.f32.mrf.mxu0
    %v1774 = vadd.f32 %v1675, %v1773
    %1775 = vdwg.mxu0
    %1776 = vmatpush.msra.mxu0 0.0
    %1777 = vmatpush.msra.mxu0 0.0
    %1778 = vmatpush.msra.mxu0 0.0
    %1779 = vmatpush.msra.mxu0 0.0
    %1780 = vmatpush.msra.mxu0 0.0
    %1781 = vmatpush.msra.mxu0 0.0
    %1782 = vmatpush.msra.mxu0 0.0
    %1783 = vmatpush.msra.mxu0 0.0
    %1784 = vmatpush.msra.mxu0 0.0
    %1785 = vmatpush.msra.mxu0 0.0
    %1786 = vmatpush.msra.mxu0 0.0
    %1787 = vmatpush.msra.mxu0 0.0
    %1788 = vmatpush.msra.mxu0 0.0
    %1789 = vmatpush.msra.mxu0 0.0
    %1790 = vmatpush.msra.mxu0 %v1652
    %1791 = vmatpush.msra.mxu0 %v1648
    %1792 = vmatmul.f32.gmra.mxu0 %v1678
    %v1793 = vpop.f32.mrf.mxu0
    %v1794 = vadd.f32 %v1660, %v1793
    %1795 = vmatmul.f32.gmra.mxu0 %v1681
    %v1796 = vpop.f32.mrf.mxu0
    %v1797 = vadd.f32 %v1665, %v1796
    %1798 = vmatmul.f32.gmra.mxu0 %v1684
    %v1799 = vpop.f32.mrf.mxu0
    %v1800 = vadd.f32 %v1670, %v1799
    %1801 = vmatmul.f32.gmra.mxu0 %v1687
    %v1802 = vpop.f32.mrf.mxu0
    %v1803 = vadd.f32 %v1675, %v1802
    %1804 = vdwg.mxu0
    %v1805 = vmax.f32 %v1707, 0.0
    %v1806 = vmax.f32 %v1736, 0.0
    %v1807 = vmax.f32 %v1765, 0.0
    %v1808 = vmax.f32 %v1794, 0.0
    %v1809 = vmax.f32 %v1710, 0.0
    %v1810 = vmax.f32 %v1739, 0.0
    %v1811 = vmax.f32 %v1768, 0.0
    %v1812 = vmax.f32 %v1797, 0.0
    %v1813 = vmax.f32 %v1713, 0.0
    %v1814 = vmax.f32 %v1742, 0.0
    %v1815 = vmax.f32 %v1771, 0.0
    %v1816 = vmax.f32 %v1800, 0.0
    %v1817 = vmax.f32 %v1716, 0.0
    %v1818 = vmax.f32 %v1745, 0.0
    %v1819 = vmax.f32 %v1774, 0.0
    %v1820 = vmax.f32 %v1803, 0.0
    %v1821 = vld [vmem:[%s11] sm:$0xff]
    %v1822 = vld [vmem:[%s11 + $0x8] sm:$0xf]
    %v1823 = vld [vmem:[%s12] sm:$0xff]
    %v1824 = vld [vmem:[%s12 + $0x8] sm:$0xf]
    %1826 = vset.pattern.permute.xlu0 0
    %1827 = vperm.xlu0 %1826, %v1823
    %v1828 = vpop.permute.xlu0 %1827
    %1831 = vset.pattern.permute.xlu0 0
    %1832 = vperm.xlu0 %1831, %v1824
    %v1833 = vpop.permute.xlu0 %1832
    %v1836 = vsel %vm1179, %v1821, 0
    %v1839 = vsel %vm1179, %v1822, 0
    %1841 = vmatpush.msra.mxu0 0.0
    %1842 = vmatpush.msra.mxu0 0.0
    %1843 = vmatpush.msra.mxu0 0.0
    %1844 = vmatpush.msra.mxu0 0.0
    %1845 = vmatpush.msra.mxu0 0.0
    %1846 = vmatpush.msra.mxu0 0.0
    %1847 = vmatpush.msra.mxu0 0.0
    %1848 = vmatpush.msra.mxu0 0.0
    %1849 = vmatpush.msra.mxu0 0.0
    %1850 = vmatpush.msra.mxu0 0.0
    %1851 = vmatpush.msra.mxu0 0.0
    %1852 = vmatpush.msra.mxu0 0.0
    %1853 = vmatpush.msra.mxu0 0.0
    %1854 = vmatpush.msra.mxu0 0.0
    %1855 = vmatpush.msra.mxu0 0.0
    %1856 = vmatpush.msra.mxu0 %v1805
    %1857 = vmatmul.f32.gmra.mxu0 %v1836
    %v1858 = vpop.f32.mrf.mxu0
    %v1859 = vadd.f32 %v1828, %v1858
    %1860 = vmatmul.f32.gmra.mxu0 %v1839
    %v1861 = vpop.f32.mrf.mxu0
    %v1862 = vadd.f32 %v1833, %v1861
    %1863 = vdwg.mxu0
    %1864 = vmatpush.msra.mxu0 0.0
    %1865 = vmatpush.msra.mxu0 0.0
    %1866 = vmatpush.msra.mxu0 0.0
    %1867 = vmatpush.msra.mxu0 0.0
    %1868 = vmatpush.msra.mxu0 0.0
    %1869 = vmatpush.msra.mxu0 0.0
    %1870 = vmatpush.msra.mxu0 0.0
    %1871 = vmatpush.msra.mxu0 0.0
    %1872 = vmatpush.msra.mxu0 0.0
    %1873 = vmatpush.msra.mxu0 0.0
    %1874 = vmatpush.msra.mxu0 0.0
    %1875 = vmatpush.msra.mxu0 0.0
    %1876 = vmatpush.msra.mxu0 0.0
    %1877 = vmatpush.msra.mxu0 0.0
    %1878 = vmatpush.msra.mxu0 0.0
    %1879 = vmatpush.msra.mxu0 %v1806
    %1880 = vmatmul.f32.gmra.mxu0 %v1836
    %v1881 = vpop.f32.mrf.mxu0
    %v1882 = vadd.f32 %v1828, %v1881
    %1883 = vmatmul.f32.gmra.mxu0 %v1839
    %v1884 = vpop.f32.mrf.mxu0
    %v1885 = vadd.f32 %v1833, %v1884
    %1886 = vdwg.mxu0
    %1887 = vmatpush.msra.mxu0 0.0
    %1888 = vmatpush.msra.mxu0 0.0
    %1889 = vmatpush.msra.mxu0 0.0
    %1890 = vmatpush.msra.mxu0 0.0
    %1891 = vmatpush.msra.mxu0 0.0
    %1892 = vmatpush.msra.mxu0 0.0
    %1893 = vmatpush.msra.mxu0 0.0
    %1894 = vmatpush.msra.mxu0 0.0
    %1895 = vmatpush.msra.mxu0 0.0
    %1896 = vmatpush.msra.mxu0 0.0
    %1897 = vmatpush.msra.mxu0 0.0
    %1898 = vmatpush.msra.mxu0 0.0
    %1899 = vmatpush.msra.mxu0 0.0
    %1900 = vmatpush.msra.mxu0 0.0
    %1901 = vmatpush.msra.mxu0 0.0
    %1902 = vmatpush.msra.mxu0 %v1807
    %1903 = vmatmul.f32.gmra.mxu0 %v1836
    %v1904 = vpop.f32.mrf.mxu0
    %v1905 = vadd.f32 %v1828, %v1904
    %1906 = vmatmul.f32.gmra.mxu0 %v1839
    %v1907 = vpop.f32.mrf.mxu0
    %v1908 = vadd.f32 %v1833, %v1907
    %1909 = vdwg.mxu0
    %1910 = vmatpush.msra.mxu0 0.0
    %1911 = vmatpush.msra.mxu0 0.0
    %1912 = vmatpush.msra.mxu0 0.0
    %1913 = vmatpush.msra.mxu0 0.0
    %1914 = vmatpush.msra.mxu0 0.0
    %1915 = vmatpush.msra.mxu0 0.0
    %1916 = vmatpush.msra.mxu0 0.0
    %1917 = vmatpush.msra.mxu0 0.0
    %1918 = vmatpush.msra.mxu0 0.0
    %1919 = vmatpush.msra.mxu0 0.0
    %1920 = vmatpush.msra.mxu0 0.0
    %1921 = vmatpush.msra.mxu0 0.0
    %1922 = vmatpush.msra.mxu0 0.0
    %1923 = vmatpush.msra.mxu0 0.0
    %1924 = vmatpush.msra.mxu0 0.0
    %1925 = vmatpush.msra.mxu0 %v1808
    %1926 = vmatmul.f32.gmra.mxu0 %v1836
    %v1927 = vpop.f32.mrf.mxu0
    %v1928 = vadd.f32 %v1828, %v1927
    %1929 = vmatmul.f32.gmra.mxu0 %v1839
    %v1930 = vpop.f32.mrf.mxu0
    %v1931 = vadd.f32 %v1833, %v1930
    %1932 = vdwg.mxu0
    %1933 = vst [vmem:[%s13] sm:$0xff] %v1859
    %1934 = vst [vmem:[%s13 + $0x8] sm:$0xff] %v1882
    %1935 = vst [vmem:[%s13 + $0x10] sm:$0xff] %v1905
    %1936 = vst [vmem:[%s13 + $0x18] sm:$0xff] %v1928
    %1937 = vst [vmem:[%s13 + $0x20] sm:$0xf] %v1862
    %1938 = vst [vmem:[%s13 + $0x28] sm:$0xf] %v1885
    %1939 = vst [vmem:[%s13 + $0x30] sm:$0xf] %v1908
    %1940 = vst [vmem:[%s13 + $0x38] sm:$0xf] %v1931
    %v1941 = vld [vmem:[%s11] sm:$0xff]
    %v1942 = vld [vmem:[%s11 + $0x8] sm:$0xf]
    %v1943 = vld [vmem:[%s12] sm:$0xff]
    %v1944 = vld [vmem:[%s12 + $0x8] sm:$0xf]
    %1946 = vset.pattern.permute.xlu0 0
    %1947 = vperm.xlu0 %1946, %v1943
    %v1948 = vpop.permute.xlu0 %1947
    %1951 = vset.pattern.permute.xlu0 0
    %1952 = vperm.xlu0 %1951, %v1944
    %v1953 = vpop.permute.xlu0 %1952
    %v1956 = vsel %vm1179, %v1941, 0
    %v1959 = vsel %vm1179, %v1942, 0
    %1961 = vmatpush.msra.mxu0 0.0
    %1962 = vmatpush.msra.mxu0 0.0
    %1963 = vmatpush.msra.mxu0 0.0
    %1964 = vmatpush.msra.mxu0 0.0
    %1965 = vmatpush.msra.mxu0 0.0
    %1966 = vmatpush.msra.mxu0 0.0
    %1967 = vmatpush.msra.mxu0 0.0
    %1968 = vmatpush.msra.mxu0 0.0
    %1969 = vmatpush.msra.mxu0 0.0
    %1970 = vmatpush.msra.mxu0 0.0
    %1971 = vmatpush.msra.mxu0 0.0
    %1972 = vmatpush.msra.mxu0 0.0
    %1973 = vmatpush.msra.mxu0 0.0
    %1974 = vmatpush.msra.mxu0 0.0
    %1975 = vmatpush.msra.mxu0 0.0
    %1976 = vmatpush.msra.mxu0 %v1809
    %1977 = vmatmul.f32.gmra.mxu0 %v1956
    %v1978 = vpop.f32.mrf.mxu0
    %v1979 = vadd.f32 %v1948, %v1978
    %1980 = vmatmul.f32.gmra.mxu0 %v1959
    %v1981 = vpop.f32.mrf.mxu0
    %v1982 = vadd.f32 %v1953, %v1981
    %1983 = vdwg.mxu0
    %1984 = vmatpush.msra.mxu0 0.0
    %1985 = vmatpush.msra.mxu0 0.0
    %1986 = vmatpush.msra.mxu0 0.0
    %1987 = vmatpush.msra.mxu0 0.0
    %1988 = vmatpush.msra.mxu0 0.0
    %1989 = vmatpush.msra.mxu0 0.0
    %1990 = vmatpush.msra.mxu0 0.0
    %1991 = vmatpush.msra.mxu0 0.0
    %1992 = vmatpush.msra.mxu0 0.0
    %1993 = vmatpush.msra.mxu0 0.0
    %1994 = vmatpush.msra.mxu0 0.0
    %1995 = vmatpush.msra.mxu0 0.0
    %1996 = vmatpush.msra.mxu0 0.0
    %1997 = vmatpush.msra.mxu0 0.0
    %1998 = vmatpush.msra.mxu0 0.0
    %1999 = vmatpush.msra.mxu0 %v1810
    %2000 = vmatmul.f32.gmra.mxu0 %v1956
    %v2001 = vpop.f32.mrf.mxu0
    %v2002 = vadd.f32 %v1948, %v2001
    %2003 = vmatmul.f32.gmra.mxu0 %v1959
    %v2004 = vpop.f32.mrf.mxu0
    %v2005 = vadd.f32 %v1953, %v2004
    %2006 = vdwg.mxu0
    %2007 = vmatpush.msra.mxu0 0.0
    %2008 = vmatpush.msra.mxu0 0.0
    %2009 = vmatpush.msra.mxu0 0.0
    %2010 = vmatpush.msra.mxu0 0.0
    %2011 = vmatpush.msra.mxu0 0.0
    %2012 = vmatpush.msra.mxu0 0.0
    %2013 = vmatpush.msra.mxu0 0.0
    %2014 = vmatpush.msra.mxu0 0.0
    %2015 = vmatpush.msra.mxu0 0.0
    %2016 = vmatpush.msra.mxu0 0.0
    %2017 = vmatpush.msra.mxu0 0.0
    %2018 = vmatpush.msra.mxu0 0.0
    %2019 = vmatpush.msra.mxu0 0.0
    %2020 = vmatpush.msra.mxu0 0.0
    %2021 = vmatpush.msra.mxu0 0.0
    %2022 = vmatpush.msra.mxu0 %v1811
    %2023 = vmatmul.f32.gmra.mxu0 %v1956
    %v2024 = vpop.f32.mrf.mxu0
    %v2025 = vadd.f32 %v1948, %v2024
    %2026 = vmatmul.f32.gmra.mxu0 %v1959
    %v2027 = vpop.f32.mrf.mxu0
    %v2028 = vadd.f32 %v1953, %v2027
    %2029 = vdwg.mxu0
    %2030 = vmatpush.msra.mxu0 0.0
    %2031 = vmatpush.msra.mxu0 0.0
    %2032 = vmatpush.msra.mxu0 0.0
    %2033 = vmatpush.msra.mxu0 0.0
    %2034 = vmatpush.msra.mxu0 0.0
    %2035 = vmatpush.msra.mxu0 0.0
    %2036 = vmatpush.msra.mxu0 0.0
    %2037 = vmatpush.msra.mxu0 0.0
    %2038 = vmatpush.msra.mxu0 0.0
    %2039 = vmatpush.msra.mxu0 0.0
    %2040 = vmatpush.msra.mxu0 0.0
    %2041 = vmatpush.msra.mxu0 0.0
    %2042 = vmatpush.msra.mxu0 0.0
    %2043 = vmatpush.msra.mxu0 0.0
    %2044 = vmatpush.msra.mxu0 0.0
    %2045 = vmatpush.msra.mxu0 %v1812
    %2046 = vmatmul.f32.gmra.mxu0 %v1956
    %v2047 = vpop.f32.mrf.mxu0
    %v2048 = vadd.f32 %v1948, %v2047
    %2049 = vmatmul.f32.gmra.mxu0 %v1959
    %v2050 = vpop.f32.mrf.mxu0
    %v2051 = vadd.f32 %v1953, %v2050
    %2052 = vdwg.mxu0
    %s2053 = scalar_lea.vmem %s13, 64
    %2054 = vst [vmem:[%s2053] sm:$0xff] %v1979
    %2055 = vst [vmem:[%s2053 + $0x8] sm:$0xff] %v2002
    %2056 = vst [vmem:[%s2053 + $0x10] sm:$0xff] %v2025
    %2057 = vst [vmem:[%s2053 + $0x18] sm:$0xff] %v2048
    %2058 = vst [vmem:[%s2053 + $0x20] sm:$0xf] %v1982
    %2059 = vst [vmem:[%s2053 + $0x28] sm:$0xf] %v2005
    %2060 = vst [vmem:[%s2053 + $0x30] sm:$0xf] %v2028
    %2061 = vst [vmem:[%s2053 + $0x38] sm:$0xf] %v2051
    %v2062 = vld [vmem:[%s11] sm:$0xff]
    %v2063 = vld [vmem:[%s11 + $0x8] sm:$0xf]
    %v2064 = vld [vmem:[%s12] sm:$0xff]
    %v2065 = vld [vmem:[%s12 + $0x8] sm:$0xf]
    %2067 = vset.pattern.permute.xlu0 0
    %2068 = vperm.xlu0 %2067, %v2064
    %v2069 = vpop.permute.xlu0 %2068
    %2072 = vset.pattern.permute.xlu0 0
    %2073 = vperm.xlu0 %2072, %v2065
    %v2074 = vpop.permute.xlu0 %2073
    %v2077 = vsel %vm1179, %v2062, 0
    %v2080 = vsel %vm1179, %v2063, 0
    %2082 = vmatpush.msra.mxu0 0.0
    %2083 = vmatpush.msra.mxu0 0.0
    %2084 = vmatpush.msra.mxu0 0.0
    %2085 = vmatpush.msra.mxu0 0.0
    %2086 = vmatpush.msra.mxu0 0.0
    %2087 = vmatpush.msra.mxu0 0.0
    %2088 = vmatpush.msra.mxu0 0.0
    %2089 = vmatpush.msra.mxu0 0.0
    %2090 = vmatpush.msra.mxu0 0.0
    %2091 = vmatpush.msra.mxu0 0.0
    %2092 = vmatpush.msra.mxu0 0.0
    %2093 = vmatpush.msra.mxu0 0.0
    %2094 = vmatpush.msra.mxu0 0.0
    %2095 = vmatpush.msra.mxu0 0.0
    %2096 = vmatpush.msra.mxu0 0.0
    %2097 = vmatpush.msra.mxu0 %v1813
    %2098 = vmatmul.f32.gmra.mxu0 %v2077
    %v2099 = vpop.f32.mrf.mxu0
    %v2100 = vadd.f32 %v2069, %v2099
    %2101 = vmatmul.f32.gmra.mxu0 %v2080
    %v2102 = vpop.f32.mrf.mxu0
    %v2103 = vadd.f32 %v2074, %v2102
    %2104 = vdwg.mxu0
    %2105 = vmatpush.msra.mxu0 0.0
    %2106 = vmatpush.msra.mxu0 0.0
    %2107 = vmatpush.msra.mxu0 0.0
    %2108 = vmatpush.msra.mxu0 0.0
    %2109 = vmatpush.msra.mxu0 0.0
    %2110 = vmatpush.msra.mxu0 0.0
    %2111 = vmatpush.msra.mxu0 0.0
    %2112 = vmatpush.msra.mxu0 0.0
    %2113 = vmatpush.msra.mxu0 0.0
    %2114 = vmatpush.msra.mxu0 0.0
    %2115 = vmatpush.msra.mxu0 0.0
    %2116 = vmatpush.msra.mxu0 0.0
    %2117 = vmatpush.msra.mxu0 0.0
    %2118 = vmatpush.msra.mxu0 0.0
    %2119 = vmatpush.msra.mxu0 0.0
    %2120 = vmatpush.msra.mxu0 %v1814
    %2121 = vmatmul.f32.gmra.mxu0 %v2077
    %v2122 = vpop.f32.mrf.mxu0
    %v2123 = vadd.f32 %v2069, %v2122
    %2124 = vmatmul.f32.gmra.mxu0 %v2080
    %v2125 = vpop.f32.mrf.mxu0
    %v2126 = vadd.f32 %v2074, %v2125
    %2127 = vdwg.mxu0
    %2128 = vmatpush.msra.mxu0 0.0
    %2129 = vmatpush.msra.mxu0 0.0
    %2130 = vmatpush.msra.mxu0 0.0
    %2131 = vmatpush.msra.mxu0 0.0
    %2132 = vmatpush.msra.mxu0 0.0
    %2133 = vmatpush.msra.mxu0 0.0
    %2134 = vmatpush.msra.mxu0 0.0
    %2135 = vmatpush.msra.mxu0 0.0
    %2136 = vmatpush.msra.mxu0 0.0
    %2137 = vmatpush.msra.mxu0 0.0
    %2138 = vmatpush.msra.mxu0 0.0
    %2139 = vmatpush.msra.mxu0 0.0
    %2140 = vmatpush.msra.mxu0 0.0
    %2141 = vmatpush.msra.mxu0 0.0
    %2142 = vmatpush.msra.mxu0 0.0
    %2143 = vmatpush.msra.mxu0 %v1815
    %2144 = vmatmul.f32.gmra.mxu0 %v2077
    %v2145 = vpop.f32.mrf.mxu0
    %v2146 = vadd.f32 %v2069, %v2145
    %2147 = vmatmul.f32.gmra.mxu0 %v2080
    %v2148 = vpop.f32.mrf.mxu0
    %v2149 = vadd.f32 %v2074, %v2148
    %2150 = vdwg.mxu0
    %2151 = vmatpush.msra.mxu0 0.0
    %2152 = vmatpush.msra.mxu0 0.0
    %2153 = vmatpush.msra.mxu0 0.0
    %2154 = vmatpush.msra.mxu0 0.0
    %2155 = vmatpush.msra.mxu0 0.0
    %2156 = vmatpush.msra.mxu0 0.0
    %2157 = vmatpush.msra.mxu0 0.0
    %2158 = vmatpush.msra.mxu0 0.0
    %2159 = vmatpush.msra.mxu0 0.0
    %2160 = vmatpush.msra.mxu0 0.0
    %2161 = vmatpush.msra.mxu0 0.0
    %2162 = vmatpush.msra.mxu0 0.0
    %2163 = vmatpush.msra.mxu0 0.0
    %2164 = vmatpush.msra.mxu0 0.0
    %2165 = vmatpush.msra.mxu0 0.0
    %2166 = vmatpush.msra.mxu0 %v1816
    %2167 = vmatmul.f32.gmra.mxu0 %v2077
    %v2168 = vpop.f32.mrf.mxu0
    %v2169 = vadd.f32 %v2069, %v2168
    %2170 = vmatmul.f32.gmra.mxu0 %v2080
    %v2171 = vpop.f32.mrf.mxu0
    %v2172 = vadd.f32 %v2074, %v2171
    %2173 = vdwg.mxu0
    %s2174 = scalar_lea.vmem %s13, 128
    %2175 = vst [vmem:[%s2174] sm:$0xff] %v2100
    %2176 = vst [vmem:[%s2174 + $0x8] sm:$0xff] %v2123
    %2177 = vst [vmem:[%s2174 + $0x10] sm:$0xff] %v2146
    %2178 = vst [vmem:[%s2174 + $0x18] sm:$0xff] %v2169
    %2179 = vst [vmem:[%s2174 + $0x20] sm:$0xf] %v2103
    %2180 = vst [vmem:[%s2174 + $0x28] sm:$0xf] %v2126
    %2181 = vst [vmem:[%s2174 + $0x30] sm:$0xf] %v2149
    %2182 = vst [vmem:[%s2174 + $0x38] sm:$0xf] %v2172
    %v2183 = vld [vmem:[%s11] sm:$0xff]
    %v2184 = vld [vmem:[%s11 + $0x8] sm:$0xf]
    %v2185 = vld [vmem:[%s12] sm:$0xff]
    %v2186 = vld [vmem:[%s12 + $0x8] sm:$0xf]
    %2188 = vset.pattern.permute.xlu0 0
    %2189 = vperm.xlu0 %2188, %v2185
    %v2190 = vpop.permute.xlu0 %2189
    %2193 = vset.pattern.permute.xlu0 0
    %2194 = vperm.xlu0 %2193, %v2186
    %v2195 = vpop.permute.xlu0 %2194
    %v2198 = vsel %vm1179, %v2183, 0
    %v2201 = vsel %vm1179, %v2184, 0
    %2203 = vmatpush.msra.mxu0 0.0
    %2204 = vmatpush.msra.mxu0 0.0
    %2205 = vmatpush.msra.mxu0 0.0
    %2206 = vmatpush.msra.mxu0 0.0
    %2207 = vmatpush.msra.mxu0 0.0
    %2208 = vmatpush.msra.mxu0 0.0
    %2209 = vmatpush.msra.mxu0 0.0
    %2210 = vmatpush.msra.mxu0 0.0
    %2211 = vmatpush.msra.mxu0 0.0
    %2212 = vmatpush.msra.mxu0 0.0
    %2213 = vmatpush.msra.mxu0 0.0
    %2214 = vmatpush.msra.mxu0 0.0
    %2215 = vmatpush.msra.mxu0 0.0
    %2216 = vmatpush.msra.mxu0 0.0
    %2217 = vmatpush.msra.mxu0 0.0
    %2218 = vmatpush.msra.mxu0 %v1817
    %2219 = vmatmul.f32.gmra.mxu0 %v2198
    %v2220 = vpop.f32.mrf.mxu0
    %v2221 = vadd.f32 %v2190, %v2220
    %2222 = vmatmul.f32.gmra.mxu0 %v2201
    %v2223 = vpop.f32.mrf.mxu0
    %v2224 = vadd.f32 %v2195, %v2223
    %2225 = vdwg.mxu0
    %2226 = vmatpush.msra.mxu0 0.0
    %2227 = vmatpush.msra.mxu0 0.0
    %2228 = vmatpush.msra.mxu0 0.0
    %2229 = vmatpush.msra.mxu0 0.0
    %2230 = vmatpush.msra.mxu0 0.0
    %2231 = vmatpush.msra.mxu0 0.0
    %2232 = vmatpush.msra.mxu0 0.0
    %2233 = vmatpush.msra.mxu0 0.0
    %2234 = vmatpush.msra.mxu0 0.0
    %2235 = vmatpush.msra.mxu0 0.0
    %2236 = vmatpush.msra.mxu0 0.0
    %2237 = vmatpush.msra.mxu0 0.0
    %2238 = vmatpush.msra.mxu0 0.0
    %2239 = vmatpush.msra.mxu0 0.0
    %2240 = vmatpush.msra.mxu0 0.0
    %2241 = vmatpush.msra.mxu0 %v1818
    %2242 = vmatmul.f32.gmra.mxu0 %v2198
    %v2243 = vpop.f32.mrf.mxu0
    %v2244 = vadd.f32 %v2190, %v2243
    %2245 = vmatmul.f32.gmra.mxu0 %v2201
    %v2246 = vpop.f32.mrf.mxu0
    %v2247 = vadd.f32 %v2195, %v2246
    %2248 = vdwg.mxu0
    %2249 = vmatpush.msra.mxu0 0.0
    %2250 = vmatpush.msra.mxu0 0.0
    %2251 = vmatpush.msra.mxu0 0.0
    %2252 = vmatpush.msra.mxu0 0.0
    %2253 = vmatpush.msra.mxu0 0.0
    %2254 = vmatpush.msra.mxu0 0.0
    %2255 = vmatpush.msra.mxu0 0.0
    %2256 = vmatpush.msra.mxu0 0.0
    %2257 = vmatpush.msra.mxu0 0.0
    %2258 = vmatpush.msra.mxu0 0.0
    %2259 = vmatpush.msra.mxu0 0.0
    %2260 = vmatpush.msra.mxu0 0.0
    %2261 = vmatpush.msra.mxu0 0.0
    %2262 = vmatpush.msra.mxu0 0.0
    %2263 = vmatpush.msra.mxu0 0.0
    %2264 = vmatpush.msra.mxu0 %v1819
    %2265 = vmatmul.f32.gmra.mxu0 %v2198
    %v2266 = vpop.f32.mrf.mxu0
    %v2267 = vadd.f32 %v2190, %v2266
    %2268 = vmatmul.f32.gmra.mxu0 %v2201
    %v2269 = vpop.f32.mrf.mxu0
    %v2270 = vadd.f32 %v2195, %v2269
    %2271 = vdwg.mxu0
    %2272 = vmatpush.msra.mxu0 0.0
    %2273 = vmatpush.msra.mxu0 0.0
    %2274 = vmatpush.msra.mxu0 0.0
    %2275 = vmatpush.msra.mxu0 0.0
    %2276 = vmatpush.msra.mxu0 0.0
    %2277 = vmatpush.msra.mxu0 0.0
    %2278 = vmatpush.msra.mxu0 0.0
    %2279 = vmatpush.msra.mxu0 0.0
    %2280 = vmatpush.msra.mxu0 0.0
    %2281 = vmatpush.msra.mxu0 0.0
    %2282 = vmatpush.msra.mxu0 0.0
    %2283 = vmatpush.msra.mxu0 0.0
    %2284 = vmatpush.msra.mxu0 0.0
    %2285 = vmatpush.msra.mxu0 0.0
    %2286 = vmatpush.msra.mxu0 0.0
    %2287 = vmatpush.msra.mxu0 %v1820
    %2288 = vmatmul.f32.gmra.mxu0 %v2198
    %v2289 = vpop.f32.mrf.mxu0
    %v2290 = vadd.f32 %v2190, %v2289
    %2291 = vmatmul.f32.gmra.mxu0 %v2201
    %v2292 = vpop.f32.mrf.mxu0
    %v2293 = vadd.f32 %v2195, %v2292
    %2294 = vdwg.mxu0
    %s2295 = scalar_lea.vmem %s13, 192
    %2296 = vst [vmem:[%s2295] sm:$0xff] %v2221
    %2297 = vst [vmem:[%s2295 + $0x8] sm:$0xff] %v2244
    %2298 = vst [vmem:[%s2295 + $0x10] sm:$0xff] %v2267
    %2299 = vst [vmem:[%s2295 + $0x18] sm:$0xff] %v2290
    %2300 = vst [vmem:[%s2295 + $0x20] sm:$0xf] %v2224
    %2301 = vst [vmem:[%s2295 + $0x28] sm:$0xf] %v2247
    %2302 = vst [vmem:[%s2295 + $0x30] sm:$0xf] %v2270
    %2303 = vst [vmem:[%s2295 + $0x38] sm:$0xf] %v2293
    // Predicated region
    $region58: #{decoder_forward.1} parent=1 // pred_check
      _
    $region59: #{decoder_forward.1} parent=1 // pred_check_branch
      %2305 = sbr.rel (0) target = $region61
    $region60: #{decoder_forward.1} parent=1 // pred_region
      _
    $region61: #{decoder_forward.1} parent=1 // pred_fallthru
      _
    // Predicated region
    $region62: #{decoder_forward.1} parent=1 // pred_check
      _
    $region63: #{decoder_forward.1} parent=1 // pred_check_branch
      %2307 = sbr.rel (0) target = $region65
    $region64: #{decoder_forward.1} parent=1 // pred_region
      _
    $region65: #{decoder_forward.1} parent=1 // pred_fallthru
      _
    %2308 = vsyncpa [#allocation5], 1

</llo_original>
